<compile_context>
chip_gen: v7x
topology: tpu7x:2x2x1
jax: 0.10.0
libtpu: 0.0.40
codegen_flags: <defaults>
</compile_context>

<pallas_src>
import jax
import jax.numpy as jnp
from jax.experimental import pallas as pl
from jax.experimental.pallas import tpu as pltpu

EPS = 1e-5


# ----------------------------------------------------------------------------
# Weight preparation: 3x3 conv as a block-banded matrix
# ----------------------------------------------------------------------------
def _banded_weights(w_conv, W):
    """(Cout, Cin, 1, 3, 3) -> (3*(W+2)*Cin, W*Cout) block-banded matrix M s.t.

        conv3x3(x)  ==  [3 H-shifted, W-zero-padded lane-dense rows]  @  M

    Row index = di*(W+2)*Cin + wp*Cin + ci, col index = w*Cout + co, with
    M[row, col] = w[co, ci, di, dj] when wp == w + dj (dj in {0,1,2}), else 0.
    """
    w = w_conv.reshape(w_conv.shape[0], w_conv.shape[1], 3, 3).astype(jnp.float32)
    Cout, Cin = w.shape[0], w.shape[1]
    eye = jnp.eye(W, dtype=jnp.float32)
    blocks = []
    for di in range(3):
        m = jnp.zeros(((W + 2) * Cin, W * Cout), jnp.float32)
        for dj in range(3):
            blk = jnp.kron(eye, jnp.transpose(w[:, :, di, dj]))   # (W*Cin, W*Cout)
            m = m.at[dj * Cin:dj * Cin + W * Cin, :].add(blk)
        blocks.append(m)
    return jnp.concatenate(blocks, axis=0)


# ----------------------------------------------------------------------------
# In-kernel body (shared by both stages)
# ----------------------------------------------------------------------------
def _conv_body(x, cin, w_ref, y_ref, stats_ref):
    """x: (Bt, H, W*cin) f32 -> conv3x3 via one MXU contraction, lane-dense I/O.

    Writes y_ref (Bt, H, W*Cout) and stats_ref (1, 2, W*Cout) = per-block
    column [sum, sum-of-squares] (folded to per-channel stats in the wrapper).
    """
    Bt, H, WCin = x.shape
    WCout = y_ref.shape[2]

    # Zero-pad one pixel in W (cin lanes each side) and one row in H, in VMEM.
    zl = jnp.zeros((Bt, H, cin), jnp.float32)
    xw = jnp.concatenate([zl, x, zl], axis=-1)                  # (Bt, H, (W+2)*cin)
    zr = jnp.zeros((Bt, 1, WCin + 2 * cin), jnp.float32)
    xp = jnp.concatenate([zr, xw, zr], axis=1)                  # (Bt, H+2, (W+2)*cin)

    # Three H-shifted views concatenated on the lane axis -> single contraction.
    rows = jnp.concatenate(
        [xp[:, 0:H, :], xp[:, 1:H + 1, :], xp[:, 2:H + 2, :]], axis=-1)
    lhs = rows.reshape(Bt * H, rows.shape[-1])                  # major-merge only

    y = jnp.dot(lhs, w_ref[...], preferred_element_type=jnp.float32)  # (Bt*H, W*Cout)

    y_ref[...] = y.reshape(Bt, H, WCout).astype(y_ref.dtype)    # major-split only
    stats_ref[...] = jnp.concatenate(
        [jnp.sum(y, axis=0, keepdims=True),
         jnp.sum(y * y, axis=0, keepdims=True)], axis=0)[None]


def _make_conv_stats_kernel(cin):
    def kernel(x_ref, w_ref, y_ref, stats_ref):
        _conv_body(x_ref[...].astype(jnp.float32), cin, w_ref, y_ref, stats_ref)
    return kernel


def _make_bnrelu_conv_stats_kernel(cin):
    def kernel(x_ref, scale_ref, bias_ref, w_ref, y_ref, stats_ref):
        # Folded bn1 + relu applied on load, on full-width lane-dense vregs.
        x = x_ref[...].astype(jnp.float32)
        x = jnp.maximum(x * scale_ref[...][None] + bias_ref[...][None], 0.0)
        _conv_body(x, cin, w_ref, y_ref, stats_ref)
    return kernel


# ----------------------------------------------------------------------------
# Wrappers around pallas_call
# ----------------------------------------------------------------------------
def _vmem_limit_bytes():
    """Generation-aware scoped-VMEM limit with a safe fallback."""
    try:
        cap = int(pltpu.get_tpu_info().vmem_capacity_bytes)
        return max(32 * 1024 * 1024, min(cap * 3 // 4, 96 * 1024 * 1024))
    except Exception:
        return 48 * 1024 * 1024   # safe on v5e / v6e (128 MiB) and v7x (64 MiB)


def _compiler_params():
    return pltpu.CompilerParams(dimension_semantics=("parallel",),
                                vmem_limit_bytes=_vmem_limit_bytes())


def _pick_block_batch(B, H, W, Cin, Cout, budget_bytes):
    """Largest divisor of B fitting a conservative VMEM budget; prefer an even
    grid-step count (balanced across v7x's two TensorCores) when that does not
    cost more than a 2x tile shrink."""
    cmax = max(Cin, Cout)
    lane = lambda c: -(-c // 128) * 128
    per_slab = 4 * (2 * H * lane(W * Cin)            # input block (double-buffered)
                    + 2 * H * lane(W * Cout)         # output block (double-buffered)
                    + 2 * H * lane(3 * (W + 2) * cmax))   # padded rows + matmul temps
    fixed = 2 * 4 * (3 * (W + 2) * cmax * lane(W * Cout))  # banded weights
    cap = max(1, (budget_bytes - fixed) // per_slab)
    divs = [d for d in range(1, B + 1) if B % d == 0 and d <= cap]
    if not divs:
        return 1
    best = max(divs)
    even = [d for d in divs if (B // d) % 2 == 0]
    if even and 2 * max(even) >= best:
        return max(even)
    return best


def _conv_bn_stage(x, w_banded, cin, cout, bt, scale_wc=None, bias_wc=None):
    """One fused stage: [optional folded BN+ReLU on load] -> conv3x3 -> stats."""
    B, H, WCin = x.shape
    W = WCin // cin
    WCout = W * cout
    nb = B // bt

    if scale_wc is None:
        kernel = _make_conv_stats_kernel(cin)
        in_specs = [pl.BlockSpec((bt, H, WCin), lambda b: (b, 0, 0)),
                    pl.BlockSpec((3 * (W + 2) * cin, WCout), lambda b: (0, 0))]
        args = (x, w_banded)
    else:
        kernel = _make_bnrelu_conv_stats_kernel(cin)
        in_specs = [pl.BlockSpec((bt, H, WCin), lambda b: (b, 0, 0)),
                    pl.BlockSpec((1, WCin), lambda b: (0, 0)),
                    pl.BlockSpec((1, WCin), lambda b: (0, 0)),
                    pl.BlockSpec((3 * (W + 2) * cin, WCout), lambda b: (0, 0))]
        args = (x, scale_wc, bias_wc, w_banded)

    y, stats = pl.pallas_call(
        kernel,
        grid=(nb,),
        in_specs=in_specs,
        out_specs=(pl.BlockSpec((bt, H, WCout), lambda b: (b, 0, 0)),
                   pl.BlockSpec((1, 2, WCout), lambda b: (b, 0, 0))),
        out_shape=(jax.ShapeDtypeStruct((B, H, WCout), jnp.float32),
                   jax.ShapeDtypeStruct((nb, 2, WCout), jnp.float32)),
        compiler_params=_compiler_params(),
    )(*args)
    return y, stats


def _fold_bn(stats, gamma, beta, n, W):
    """Fold per-block column sums into BN scale / bias (training-mode stats)."""
    s = jnp.sum(stats, axis=0).reshape(2, W, -1).sum(axis=1)   # (2, C)
    mean = s[0] / n
    var = jnp.maximum(s[1] / n - mean * mean, 0.0)             # biased, clamped
    scale = gamma * jax.lax.rsqrt(var + EPS)
    return scale, beta - mean * scale


# ----------------------------------------------------------------------------
# Full module forward
# ----------------------------------------------------------------------------
@jax.jit
def basic_3d_block_spatial(x_ncdhw, w1_conv, g1, b1, w2_conv, g2, b2):
    N, Cin, D, H, W = x_ncdhw.shape
    Cout = w1_conv.shape[0]
    B, n = N * D, N * D * H * W

    # Conv weights -> block-banded matrices (single-MXU-contraction conv).
    w1b = _banded_weights(w1_conv, W)
    w2b = _banded_weights(w2_conv, W)

    # NCDHW -> lane-dense depth-major slabs (N*D, H, W*Cin).
    x = jnp.transpose(x_ncdhw, (0, 2, 3, 4, 1)).reshape(B, H, W * Cin)

    bt = _pick_block_batch(B, H, W, Cin, Cout, _vmem_limit_bytes() // 4)

    # Stage 1: conv1 + per-block stats (fused).
    y1, st1 = _conv_bn_stage(x, w1b, Cin, Cout, bt)
    s1, t1 = _fold_bn(st1, g1, b1, n, W)

    # Stage 2: bn1+relu folded into conv2's load + stats (z1 never hits HBM).
    y2, st2 = _conv_bn_stage(y1, w2b, Cout, Cout, bt,
                             scale_wc=jnp.tile(s1, W)[None],
                             bias_wc=jnp.tile(t1, W)[None])
    s2, t2 = _fold_bn(st2, g2, b2, n, W)

    # Stage 3: bn2 + relu, fused by XLA with the unavoidable NCDHW relayout
    # (one read of y2, one write of the output; no extra HBM round trip).
    out = jnp.maximum(y2.reshape(N, D, H, W, Cout) * s2 + t2, 0.0)
    return jnp.transpose(out, (0, 4, 1, 2, 3))


# ----------------------------------------------------------------------------
# Pure-JAX reference (correctness check only)
# ----------------------------------------------------------------------------
def _reference(x_ncdhw, w1_conv, g1, b1, w2_conv, g2, b2):
    N, Cin, D, H, W = x_ncdhw.shape
    Cout = w1_conv.shape[0]
    x2d = jnp.transpose(x_ncdhw, (0, 2, 1, 3, 4)).reshape(N * D, Cin, H, W)

    def conv(x, w):
        return jax.lax.conv_general_dilated(
            x, w.reshape(w.shape[0], w.shape[1], 3, 3),
            window_strides=(1, 1), padding=((1, 1), (1, 1)),
            dimension_numbers=("NCHW", "OIHW", "NCHW"))

    def bnr(y, g, b):
        mean = y.mean(axis=(0, 2, 3), keepdims=True)
        var = y.var(axis=(0, 2, 3), keepdims=True)
        yn = (y - mean) * jax.lax.rsqrt(var + EPS)
        return jax.nn.relu(yn * g.reshape(1, -1, 1, 1) + b.reshape(1, -1, 1, 1))

    y = bnr(conv(x2d, w1_conv), g1, b1)
    y = bnr(conv(y, w2_conv), g2, b2)
    return jnp.transpose(y.reshape(N, D, Cout, H, W), (0, 2, 1, 3, 4))


# ----------------------------------------------------------------------------
if __name__ == "__main__":
    N, Cin, Cout, D, H, W = 2, 4, 8, 3, 16, 16

    key = jax.random.PRNGKey(0)
    k1, k2, kx = jax.random.split(key, 3)

    # PyTorch-shaped Conv3d weights: (out, in, 1, 3, 3), bias=False.
    w1 = 0.1 * jax.random.normal(k1, (Cout, Cin, 1, 3, 3), jnp.float32)
    w2 = 0.1 * jax.random.normal(k2, (Cout, Cout, 1, 3, 3), jnp.float32)

    # Deterministic BatchNorm affine parameters.
    g1 = 1.0 + 0.05 * jnp.arange(Cout, dtype=jnp.float32)
    b1 = 0.02 * jnp.arange(Cout, dtype=jnp.float32) - 0.05
    g2 = 1.0 - 0.03 * jnp.arange(Cout, dtype=jnp.float32)
    b2 = 0.01 * jnp.arange(Cout, dtype=jnp.float32)

    x = jax.random.normal(kx, (N, Cin, D, H, W), jnp.float32)

    out = jax.block_until_ready(basic_3d_block_spatial(x, w1, g1, b1, w2, g2, b2))
    ref = jax.block_until_ready(_reference(x, w1, g1, b1, w2, g2, b2))

    assert out.shape == (N, Cout, D, H, W), out.shape
    err = float(jnp.max(jnp.abs(out - ref)))
    assert err < 1e-4, err

    print("KERNEL_OK")
</pallas_src>

<mosaic_0001>
module attributes {stable_mosaic.version = 11 : i64} {
  func.func @kernel(%arg0: i32, %arg1: memref<3x16x64xf32, #tpu.memory_space<vmem>>, %arg2: memref<216x128xf32, #tpu.memory_space<vmem>>, %arg3: memref<3x16x128xf32, #tpu.memory_space<vmem>>, %arg4: memref<1x2x128xf32, #tpu.memory_space<vmem>>) attributes {dimension_semantics = [#tpu.dimension_semantics<parallel>], iteration_bounds = array<i64: 2>, scalar_prefetch = 0 : i64, scratch_operands = 0 : i64, tpu.core_type = #tpu.core_type<tc>, window_params = [{transform_indices = @transform_0, window_bounds = array<i64: 3, 16, 64>}, {pipeline_mode = #tpu.pipeline_mode<synchronous>, transform_indices = @transform_1, window_bounds = array<i64: 216, 128>}, {transform_indices = @transform_2, window_bounds = array<i64: 3, 16, 128>}, {transform_indices = @transform_3, window_bounds = array<i64: 1, 2, 128>}]} {
    %c0 = arith.constant 0 : index
    %c0_0 = arith.constant 0 : index
    %c0_1 = arith.constant 0 : index
    %0 = vector.load %arg1[%c0, %c0_0, %c0_1] : memref<3x16x64xf32, #tpu.memory_space<vmem>>, vector<3x16x64xf32>
    %cst = arith.constant 0.000000e+00 : f32
    %1 = vector.broadcast %cst : f32 to vector<3x16x4xf32>
    %2 = tpu.concatenate %1, %0, %1 in 2 : vector<3x16x4xf32>, vector<3x16x64xf32>, vector<3x16x4xf32> -> vector<3x16x72xf32>
    %cst_2 = arith.constant 0.000000e+00 : f32
    %3 = vector.broadcast %cst_2 : f32 to vector<3x1x72xf32>
    %4 = tpu.concatenate %3, %2, %3 in 1 : vector<3x1x72xf32>, vector<3x16x72xf32>, vector<3x1x72xf32> -> vector<3x18x72xf32>
    %5 = vector.extract_strided_slice %4 {offsets = [0, 0, 0], sizes = [3, 16, 72], strides = [1, 1, 1]} : vector<3x18x72xf32> to vector<3x16x72xf32>
    %6 = vector.extract_strided_slice %4 {offsets = [0, 1, 0], sizes = [3, 16, 72], strides = [1, 1, 1]} : vector<3x18x72xf32> to vector<3x16x72xf32>
    %7 = vector.extract_strided_slice %4 {offsets = [0, 2, 0], sizes = [3, 16, 72], strides = [1, 1, 1]} : vector<3x18x72xf32> to vector<3x16x72xf32>
    %8 = tpu.concatenate %5, %6, %7 in 2 : vector<3x16x72xf32>, vector<3x16x72xf32>, vector<3x16x72xf32> -> vector<3x16x216xf32>
    %9 = vector.shape_cast %8 : vector<3x16x216xf32> to vector<48x216xf32>
    %c0_3 = arith.constant 0 : index
    %c0_4 = arith.constant 0 : index
    %10 = vector.load %arg2[%c0_3, %c0_4] : memref<216x128xf32, #tpu.memory_space<vmem>>, vector<216x128xf32>
    %cst_5 = arith.constant dense<0.000000e+00> : vector<48x128xf32>
    %11 = tpu.matmul %9, %10, %cst_5 {dimension_numbers = #tpu.dot_dimension_numbers<[1], [0], [0], [1], [0, 0, 1, 1], [], []>} : vector<48x216xf32>, vector<216x128xf32>, vector<48x128xf32> -> vector<48x128xf32>
    %12 = vector.shape_cast %11 : vector<48x128xf32> to vector<3x16x128xf32>
    %c0_6 = arith.constant 0 : index
    %c0_7 = arith.constant 0 : index
    %c0_8 = arith.constant 0 : index
    %13 = vector.load %arg3[%c0_6, %c0_7, %c0_8] : memref<3x16x128xf32, #tpu.memory_space<vmem>>, vector<3x16x128xf32>
    tpu.vector_store %arg3[%c0_6, %c0_7, %c0_8], %12 {strides = array<i32>} : memref<3x16x128xf32, #tpu.memory_space<vmem>>, vector<3x16x128xf32>,
    %cst_9 = arith.constant dense<0.000000e+00> : vector<128xf32>
    %14 = vector.multi_reduction <add>, %11, %cst_9 [0] : vector<48x128xf32> to vector<128xf32>
    %15 = vector.shape_cast %14 : vector<128xf32> to vector<1x128xf32>
    %16 = arith.mulf %11, %11 : vector<48x128xf32>
    %cst_10 = arith.constant dense<0.000000e+00> : vector<128xf32>
    %17 = vector.multi_reduction <add>, %16, %cst_10 [0] : vector<48x128xf32> to vector<128xf32>
    %18 = vector.shape_cast %17 : vector<128xf32> to vector<1x128xf32>
    %19 = tpu.concatenate %15, %18 in 0 : vector<1x128xf32>, vector<1x128xf32> -> vector<2x128xf32>
    %20 = vector.shape_cast %19 : vector<2x128xf32> to vector<1x2x128xf32>
    %c0_11 = arith.constant 0 : index
    %c0_12 = arith.constant 0 : index
    %c0_13 = arith.constant 0 : index
    %21 = vector.load %arg4[%c0_11, %c0_12, %c0_13] : memref<1x2x128xf32, #tpu.memory_space<vmem>>, vector<1x2x128xf32>
    tpu.vector_store %arg4[%c0_11, %c0_12, %c0_13], %20 {strides = array<i32>} : memref<1x2x128xf32, #tpu.memory_space<vmem>>, vector<1x2x128xf32>,
    return
  }
  func.func @transform_0(%arg0: i32) -> (i32, i32, i32) {
    %c0_i32 = arith.constant 0 : i32
    %c0_i32_0 = arith.constant 0 : i32
    %c0_i32_1 = arith.constant 0 : i32
    return %arg0, %c0_i32, %c0_i32_0 : i32, i32, i32
  }
  func.func @transform_1(%arg0: i32) -> (i32, i32) {
    %c0_i32 = arith.constant 0 : i32
    %c0_i32_0 = arith.constant 0 : i32
    %c0_i32_1 = arith.constant 0 : i32
    return %c0_i32, %c0_i32_0 : i32, i32
  }
  func.func @transform_2(%arg0: i32) -> (i32, i32, i32) {
    %c0_i32 = arith.constant 0 : i32
    %c0_i32_0 = arith.constant 0 : i32
    %c0_i32_1 = arith.constant 0 : i32
    return %arg0, %c0_i32, %c0_i32_0 : i32, i32, i32
  }
  func.func @transform_3(%arg0: i32) -> (i32, i32, i32) {
    %c0_i32 = arith.constant 0 : i32
    %c0_i32_0 = arith.constant 0 : i32
    %c0_i32_1 = arith.constant 0 : i32
    return %arg0, %c0_i32, %c0_i32_0 : i32, i32, i32
  }
}

module attributes {stable_mosaic.version = 11 : i64} {
  func.func @kernel(%arg0: i32, %arg1: memref<3x16x128xf32, #tpu.memory_space<vmem>>, %arg2: memref<1x128xf32, #tpu.memory_space<vmem>>, %arg3: memref<1x128xf32, #tpu.memory_space<vmem>>, %arg4: memref<432x128xf32, #tpu.memory_space<vmem>>, %arg5: memref<3x16x128xf32, #tpu.memory_space<vmem>>, %arg6: memref<1x2x128xf32, #tpu.memory_space<vmem>>) attributes {dimension_semantics = [#tpu.dimension_semantics<parallel>], iteration_bounds = array<i64: 2>, scalar_prefetch = 0 : i64, scratch_operands = 0 : i64, tpu.core_type = #tpu.core_type<tc>, window_params = [{transform_indices = @transform_0, window_bounds = array<i64: 3, 16, 128>}, {pipeline_mode = #tpu.pipeline_mode<synchronous>, transform_indices = @transform_1, window_bounds = array<i64: 1, 128>}, {pipeline_mode = #tpu.pipeline_mode<synchronous>, transform_indices = @transform_2, window_bounds = array<i64: 1, 128>}, {pipeline_mode = #tpu.pipeline_mode<synchronous>, transform_indices = @transform_3, window_bounds = array<i64: 432, 128>}, {transform_indices = @transform_4, window_bounds = array<i64: 3, 16, 128>}, {transform_indices = @transform_5, window_bounds = array<i64: 1, 2, 128>}]} {
    %c0 = arith.constant 0 : index
    %c0_0 = arith.constant 0 : index
    %c0_1 = arith.constant 0 : index
    %0 = vector.load %arg1[%c0, %c0_0, %c0_1] : memref<3x16x128xf32, #tpu.memory_space<vmem>>, vector<3x16x128xf32>
    %c0_2 = arith.constant 0 : index
    %c0_3 = arith.constant 0 : index
    %1 = vector.load %arg2[%c0_2, %c0_3] : memref<1x128xf32, #tpu.memory_space<vmem>>, vector<1x128xf32>
    %2 = vector.shape_cast %1 : vector<1x128xf32> to vector<1x1x128xf32>
    %3 = vector.broadcast %2 : vector<1x1x128xf32> to vector<3x16x128xf32>
    %4 = arith.mulf %0, %3 : vector<3x16x128xf32>
    %c0_4 = arith.constant 0 : index
    %c0_5 = arith.constant 0 : index
    %5 = vector.load %arg3[%c0_4, %c0_5] : memref<1x128xf32, #tpu.memory_space<vmem>>, vector<1x128xf32>
    %6 = vector.shape_cast %5 : vector<1x128xf32> to vector<1x1x128xf32>
    %7 = vector.broadcast %6 : vector<1x1x128xf32> to vector<3x16x128xf32>
    %8 = arith.addf %4, %7 : vector<3x16x128xf32>
    %cst = arith.constant 0.000000e+00 : f32
    %9 = vector.broadcast %cst : f32 to vector<3x16x128xf32>
    %10 = arith.maximumf %8, %9 : vector<3x16x128xf32>
    %cst_6 = arith.constant 0.000000e+00 : f32
    %11 = vector.broadcast %cst_6 : f32 to vector<3x16x8xf32>
    %12 = tpu.concatenate %11, %10, %11 in 2 : vector<3x16x8xf32>, vector<3x16x128xf32>, vector<3x16x8xf32> -> vector<3x16x144xf32>
    %cst_7 = arith.constant 0.000000e+00 : f32
    %13 = vector.broadcast %cst_7 : f32 to vector<3x1x144xf32>
    %14 = tpu.concatenate %13, %12, %13 in 1 : vector<3x1x144xf32>, vector<3x16x144xf32>, vector<3x1x144xf32> -> vector<3x18x144xf32>
    %15 = vector.extract_strided_slice %14 {offsets = [0, 0, 0], sizes = [3, 16, 144], strides = [1, 1, 1]} : vector<3x18x144xf32> to vector<3x16x144xf32>
    %16 = vector.extract_strided_slice %14 {offsets = [0, 1, 0], sizes = [3, 16, 144], strides = [1, 1, 1]} : vector<3x18x144xf32> to vector<3x16x144xf32>
    %17 = vector.extract_strided_slice %14 {offsets = [0, 2, 0], sizes = [3, 16, 144], strides = [1, 1, 1]} : vector<3x18x144xf32> to vector<3x16x144xf32>
    %18 = tpu.concatenate %15, %16, %17 in 2 : vector<3x16x144xf32>, vector<3x16x144xf32>, vector<3x16x144xf32> -> vector<3x16x432xf32>
    %19 = vector.shape_cast %18 : vector<3x16x432xf32> to vector<48x432xf32>
    %c0_8 = arith.constant 0 : index
    %c0_9 = arith.constant 0 : index
    %20 = vector.load %arg4[%c0_8, %c0_9] : memref<432x128xf32, #tpu.memory_space<vmem>>, vector<432x128xf32>
    %cst_10 = arith.constant dense<0.000000e+00> : vector<48x128xf32>
    %21 = tpu.matmul %19, %20, %cst_10 {dimension_numbers = #tpu.dot_dimension_numbers<[1], [0], [0], [1], [0, 0, 1, 1], [], []>} : vector<48x432xf32>, vector<432x128xf32>, vector<48x128xf32> -> vector<48x128xf32>
    %22 = vector.shape_cast %21 : vector<48x128xf32> to vector<3x16x128xf32>
    %c0_11 = arith.constant 0 : index
    %c0_12 = arith.constant 0 : index
    %c0_13 = arith.constant 0 : index
    %23 = vector.load %arg5[%c0_11, %c0_12, %c0_13] : memref<3x16x128xf32, #tpu.memory_space<vmem>>, vector<3x16x128xf32>
    tpu.vector_store %arg5[%c0_11, %c0_12, %c0_13], %22 {strides = array<i32>} : memref<3x16x128xf32, #tpu.memory_space<vmem>>, vector<3x16x128xf32>,
    %cst_14 = arith.constant dense<0.000000e+00> : vector<128xf32>
    %24 = vector.multi_reduction <add>, %21, %cst_14 [0] : vector<48x128xf32> to vector<128xf32>
    %25 = vector.shape_cast %24 : vector<128xf32> to vector<1x128xf32>
    %26 = arith.mulf %21, %21 : vector<48x128xf32>
    %cst_15 = arith.constant dense<0.000000e+00> : vector<128xf32>
    %27 = vector.multi_reduction <add>, %26, %cst_15 [0] : vector<48x128xf32> to vector<128xf32>
    %28 = vector.shape_cast %27 : vector<128xf32> to vector<1x128xf32>
    %29 = tpu.concatenate %25, %28 in 0 : vector<1x128xf32>, vector<1x128xf32> -> vector<2x128xf32>
    %30 = vector.shape_cast %29 : vector<2x128xf32> to vector<1x2x128xf32>
    %c0_16 = arith.constant 0 : index
    %c0_17 = arith.constant 0 : index
    %c0_18 = arith.constant 0 : index
    %31 = vector.load %arg6[%c0_16, %c0_17, %c0_18] : memref<1x2x128xf32, #tpu.memory_space<vmem>>, vector<1x2x128xf32>
    tpu.vector_store %arg6[%c0_16, %c0_17, %c0_18], %30 {strides = array<i32>} : memref<1x2x128xf32, #tpu.memory_space<vmem>>, vector<1x2x128xf32>,
    return
  }
  func.func @transform_0(%arg0: i32) -> (i32, i32, i32) {
    %c0_i32 = arith.constant 0 : i32
    %c0_i32_0 = arith.constant 0 : i32
    %c0_i32_1 = arith.constant 0 : i32
    return %arg0, %c0_i32, %c0_i32_0 : i32, i32, i32
  }
  func.func @transform_1(%arg0: i32) -> (i32, i32) {
    %c0_i32 = arith.constant 0 : i32
    %c0_i32_0 = arith.constant 0 : i32
    %c0_i32_1 = arith.constant 0 : i32
    return %c0_i32, %c0_i32_0 : i32, i32
  }
  func.func @transform_2(%arg0: i32) -> (i32, i32) {
    %c0_i32 = arith.constant 0 : i32
    %c0_i32_0 = arith.constant 0 : i32
    %c0_i32_1 = arith.constant 0 : i32
    return %c0_i32, %c0_i32_0 : i32, i32
  }
  func.func @transform_3(%arg0: i32) -> (i32, i32) {
    %c0_i32 = arith.constant 0 : i32
    %c0_i32_0 = arith.constant 0 : i32
    %c0_i32_1 = arith.constant 0 : i32
    return %c0_i32, %c0_i32_0 : i32, i32
  }
  func.func @transform_4(%arg0: i32) -> (i32, i32, i32) {
    %c0_i32 = arith.constant 0 : i32
    %c0_i32_0 = arith.constant 0 : i32
    %c0_i32_1 = arith.constant 0 : i32
    return %arg0, %c0_i32, %c0_i32_0 : i32, i32, i32
  }
  func.func @transform_5(%arg0: i32) -> (i32, i32, i32) {
    %c0_i32 = arith.constant 0 : i32
    %c0_i32_0 = arith.constant 0 : i32
    %c0_i32_1 = arith.constant 0 : i32
    return %arg0, %c0_i32, %c0_i32_0 : i32, i32, i32
  }
}

</mosaic_0001>

<llo_original>
// kernel: tile.13
$region0: #{tile.13}
  #allocation0 [shape = 's32[1]{0}', space=sflag, size = 0x4, scoped, tag = 'scoped memory for tile.13']
  %s0 = inlined_call_operand.vmem [shape: f32[8], index: 0, kind: input, shape index: {}]
  %s1 = inlined_call_operand.vmem [shape: f32[16,8], index: 1, kind: output, shape index: {}]
  // Predicated region
  $region2: #{tile.13} parent=0 // pred_check
    _
  $region3: #{tile.13} parent=0 // pred_check_branch
    %3 = sbr.rel (0) target = $region5
  $region4: #{tile.13} parent=0 // pred_region
    _
  $region5: #{tile.13} parent=0 // pred_fallthru
    _
  %v4 = vld [vmem:[%s0] ss:$0 sm:$0xff]
  %5 = vst [vmem:[%s1] sm:$0xff] %v4
  %s6 = scalar_lea.vmem %s1, 8
  %7 = vst [vmem:[%s6] sm:$0xff] %v4

// kernel: tile.14
$region0: #{tile.14}
  %s0 = inlined_call_operand.vmem [shape: f32[16,8], index: 0, kind: input, shape index: {}]
  %s1 = inlined_call_operand.vmem [shape: f32[1,128], index: 1, kind: output, shape index: {}]
  $region1: #{tile.14} parent=0
    #allocation0 [shape = 'u8[4096]{0}', space=vmem, size = 0x1000, scoped, tag = 'scoped mem for output reshape']
    %v2 = vld [vmem:[%s0] sm:$0x1]
    %vm3 = vcmask 64512
    %4 = vst.msk [vmem:[#allocation0] sm:$0x1] %vm3, %v2
    %s5 = scalar_lea.vmem %s0, 15
    %v6 = vld [vmem:[%s5] sm:$0x1]
    %7 = vrot.lane.b32.xlu0 %v6, 120
    %v8 = vpop.permute.xlu0 %7
    %vm9 = vcmask 1048512
    %10 = vst.msk [vmem:[#allocation0] sm:$0x1] %vm9, %v8
    %s11 = scalar_lea.vmem %s0, 14
    %v12 = vld [vmem:[%s11] sm:$0x1]
    %13 = vrot.lane.b32.xlu0 %v12, 112
    %v14 = vpop.permute.xlu0 %13
    %vm15 = vcmask 982912
    %16 = vst.msk [vmem:[#allocation0] sm:$0x1] %vm15, %v14
    %s17 = scalar_lea.vmem %s0, 13
    %v18 = vld [vmem:[%s17] sm:$0x1]
    %19 = vrot.lane.b32.xlu0 %v18, 104
    %v20 = vpop.permute.xlu0 %19
    %vm21 = vcmask 917312
    %22 = vst.msk [vmem:[#allocation0] sm:$0x1] %vm21, %v20
    %s23 = scalar_lea.vmem %s0, 12
    %v24 = vld [vmem:[%s23] sm:$0x1]
    %25 = vrot.lane.b32.xlu0 %v24, 96
    %v26 = vpop.permute.xlu0 %25
    %vm27 = vcmask 851712
    %28 = vst.msk [vmem:[#allocation0] sm:$0x1] %vm27, %v26
    %s29 = scalar_lea.vmem %s0, 11
    %v30 = vld [vmem:[%s29] sm:$0x1]
    %31 = vrot.lane.b32.xlu0 %v30, 88
    %v32 = vpop.permute.xlu0 %31
    %vm33 = vcmask 786112
    %34 = vst.msk [vmem:[#allocation0] sm:$0x1] %vm33, %v32
    %s35 = scalar_lea.vmem %s0, 10
    %v36 = vld [vmem:[%s35] sm:$0x1]
    %37 = vrot.lane.b32.xlu0 %v36, 80
    %v38 = vpop.permute.xlu0 %37
    %vm39 = vcmask 720512
    %40 = vst.msk [vmem:[#allocation0] sm:$0x1] %vm39, %v38
    %s41 = scalar_lea.vmem %s0, 9
    %v42 = vld [vmem:[%s41] sm:$0x1]
    %43 = vrot.lane.b32.xlu0 %v42, 72
    %v44 = vpop.permute.xlu0 %43
    %vm45 = vcmask 654912
    %46 = vst.msk [vmem:[#allocation0] sm:$0x1] %vm45, %v44
    %s47 = scalar_lea.vmem %s0, 8
    %v48 = vld [vmem:[%s47] sm:$0x1]
    %49 = vrot.lane.b32.xlu0 %v48, 64
    %v50 = vpop.permute.xlu0 %49
    %vm51 = vcmask 589312
    %52 = vst.msk [vmem:[#allocation0] sm:$0x1] %vm51, %v50
    %s53 = scalar_lea.vmem %s0, 7
    %v54 = vld [vmem:[%s53] sm:$0x1]
    %55 = vrot.lane.b32.xlu0 %v54, 56
    %v56 = vpop.permute.xlu0 %55
    %vm57 = vcmask 523712
    %58 = vst.msk [vmem:[#allocation0] sm:$0x1] %vm57, %v56
    %s59 = scalar_lea.vmem %s0, 6
    %v60 = vld [vmem:[%s59] sm:$0x1]
    %61 = vrot.lane.b32.xlu0 %v60, 48
    %v62 = vpop.permute.xlu0 %61
    %vm63 = vcmask 458112
    %64 = vst.msk [vmem:[#allocation0] sm:$0x1] %vm63, %v62
    %s65 = scalar_lea.vmem %s0, 5
    %v66 = vld [vmem:[%s65] sm:$0x1]
    %67 = vrot.lane.b32.xlu0 %v66, 40
    %v68 = vpop.permute.xlu0 %67
    %vm69 = vcmask 392512
    %70 = vst.msk [vmem:[#allocation0] sm:$0x1] %vm69, %v68
    %s71 = scalar_lea.vmem %s0, 4
    %v72 = vld [vmem:[%s71] sm:$0x1]
    %73 = vrot.lane.b32.xlu0 %v72, 32
    %v74 = vpop.permute.xlu0 %73
    %vm75 = vcmask 326912
    %76 = vst.msk [vmem:[#allocation0] sm:$0x1] %vm75, %v74
    %s77 = scalar_lea.vmem %s0, 3
    %v78 = vld [vmem:[%s77] sm:$0x1]
    %79 = vrot.lane.b32.xlu0 %v78, 24
    %v80 = vpop.permute.xlu0 %79
    %vm81 = vcmask 261312
    %82 = vst.msk [vmem:[#allocation0] sm:$0x1] %vm81, %v80
    %s83 = scalar_lea.vmem %s0, 2
    %v84 = vld [vmem:[%s83] sm:$0x1]
    %85 = vrot.lane.b32.xlu0 %v84, 16
    %v86 = vpop.permute.xlu0 %85
    %vm87 = vcmask 195712
    %88 = vst.msk [vmem:[#allocation0] sm:$0x1] %vm87, %v86
    %s89 = scalar_lea.vmem %s0, 1
    %v90 = vld [vmem:[%s89] sm:$0x1]
    %91 = vrot.lane.b32.xlu0 %v90, 8
    %v92 = vpop.permute.xlu0 %91
    %vm93 = vcmask 130112
    %94 = vst.msk [vmem:[#allocation0] sm:$0x1] %vm93, %v92
    %s96 = sshllo.u32 0, 1
    %v98 = vld [vmem:[#allocation0] sm:%s96]
    %s99 = sshllo.u32 0, 1
    %100 = vst [vmem:[%s1] sm:%s99] %v98

// kernel: basic_3d_block_spatial.2
$region0: #{basic_3d_block_spatial.2}
  #allocation0 [shape = 'u32[]', space=smem, size = 0x4, offset = 0x4, fixed_abs, tag = 'smem constant byte address 0x4 - core index']
  #allocation1 [shape = 'u32[144,128]{1,0:T(1,128)}', space=vmem, size = 0x12000, scoped, tag = 'internal scratch']
  %s0 = inlined_call_operand.vmem [shape: f32[6,16,64], index: 0, kind: input, shape index: {}]
  %s1 = inlined_call_operand.vmem [shape: f32[216,128], index: 1, kind: input, shape index: {}]
  %s2 = inlined_call_operand.vmem [shape: f32[6,16,128], index: 2, kind: output, shape index: {0}]
  %s3 = inlined_call_operand.vmem [shape: f32[2,2,128], index: 3, kind: output, shape index: {1}]
  %4 = xla_tuple %s2, %s3
  %s5 = sld [smem:[#allocation0]]
  $region49: #{basic_3d_block_spatial.2} parent=0
    _
  %s7 = ssub.s32 1, %s5
  %s8 = scalar_select 0, %s7, %s5
  loop: start=0, step=1, limit=4
  $region2: #{basic_3d_block_spatial.2} parent=0 // loop_pre_header
    _
  $region3: #{basic_3d_block_spatial.2} parent=0 // loop_header
    %s10 = sphi 0, %s14
    %p11 = scmp.ge.s32.totalorder %s10, 4
    %s20 = sphi 0, %s22
    %s23 = sphi 0, %s20
    %s24 = sphi 0, %s23
    %s40 = sphi 0, %s24
    %s44 = sphi 0, %s44
    %s46 = sphi 0, %s44
    %s47 = sphi 0, %s46
    %s61 = sphi 0, %s47
    %s67 = sphi 0, %s69
    %s70 = sphi 0, %s67
    %s71 = sphi 0, %s70
    %s87 = sphi 0, %s71
    %s93 = sphi 0, %s95
    %s96 = sphi 0, %s93
    %s97 = sphi 0, %s96
    %s113 = sphi 0, %s97
  $region4: #{basic_3d_block_spatial.2} parent=0 // loop_header_branch
    %13 = sbr.rel (%p11) target = $region8
  $region5: #{basic_3d_block_spatial.2} parent=0 // loop_body
    %s15 = ssub.s32 %s10, 1
    %s16 = ssub.s32 %s10, 2
    %s17 = sadd.s32 %s10, 1
    %s18 = ssub.s32 %s10, %s17
    %p19 = scmp.eq.s32.totalorder %s18, 0
    %s21 = sadd.s32 %s20, 1
    %s22 = scalar_select %p19, %s20, %s21
    %p25 = pneg %p19
    %p26 = scmp.eq.s32.totalorder %s10, 1
    %p27 = por %p25, %p26
    %p28 = scmp.ne.s32.totalorder %s20, %s23
    %p29 = scmp.eq.s32.totalorder %s10, 0
    %p30 = por %p28, %p29
    %p31 = scmp.ne.s32.totalorder %s20, %s23
    %p32 = scmp.eq.s32.totalorder %s15, 1
    %p33 = por %p31, %p32
    %p34 = scmp.ne.s32.totalorder %s23, %s24
    %p35 = scmp.eq.s32.totalorder %s15, 0
    %p36 = por %p34, %p35
    %p37 = scmp.ne.s32.totalorder %s23, %s24
    %p38 = scmp.eq.s32.totalorder %s16, 1
    %p39 = por %p37, %p38
    %p41 = scmp.ne.s32.totalorder %s24, %s40
    %p42 = scmp.eq.s32.totalorder %s16, 0
    %p43 = por %p41, %p42
    %s45 = sadd.s32 %s44, 1
    %p48 = scmp.eq.s32.totalorder %s10, 1
    %p49 = scmp.ne.s32.totalorder %s44, %s46
    %p50 = scmp.eq.s32.totalorder %s10, 0
    %p51 = por %p49, %p50
    %p52 = scmp.ne.s32.totalorder %s44, %s46
    %p53 = scmp.eq.s32.totalorder %s15, 1
    %p54 = por %p52, %p53
    %p55 = scmp.ne.s32.totalorder %s46, %s47
    %p56 = scmp.eq.s32.totalorder %s15, 0
    %p57 = por %p55, %p56
    %p58 = scmp.ne.s32.totalorder %s46, %s47
    %p59 = scmp.eq.s32.totalorder %s16, 1
    %p60 = por %p58, %p59
    %p62 = scmp.ne.s32.totalorder %s47, %s61
    %p63 = scmp.eq.s32.totalorder %s16, 0
    %p64 = por %p62, %p63
    %s65 = ssub.s32 %s10, %s17
    %p66 = scmp.eq.s32.totalorder %s65, 0
    %s68 = sadd.s32 %s67, 1
    %s69 = scalar_select %p66, %s67, %s68
    %p72 = pneg %p66
    %p73 = scmp.eq.s32.totalorder %s10, 1
    %p74 = por %p72, %p73
    %p75 = scmp.ne.s32.totalorder %s67, %s70
    %p76 = scmp.eq.s32.totalorder %s10, 0
    %p77 = por %p75, %p76
    %p78 = scmp.ne.s32.totalorder %s67, %s70
    %p79 = scmp.eq.s32.totalorder %s15, 1
    %p80 = por %p78, %p79
    %p81 = scmp.ne.s32.totalorder %s70, %s71
    %p82 = scmp.eq.s32.totalorder %s15, 0
    %p83 = por %p81, %p82
    %p84 = scmp.ne.s32.totalorder %s70, %s71
    %p85 = scmp.eq.s32.totalorder %s16, 1
    %p86 = por %p84, %p85
    %p88 = scmp.ne.s32.totalorder %s71, %s87
    %p89 = scmp.eq.s32.totalorder %s16, 0
    %p90 = por %p88, %p89
    %s91 = ssub.s32 %s10, %s17
    %p92 = scmp.eq.s32.totalorder %s91, 0
    %s94 = sadd.s32 %s93, 1
    %s95 = scalar_select %p92, %s93, %s94
    %p98 = pneg %p92
    %p99 = scmp.eq.s32.totalorder %s10, 1
    %p100 = por %p98, %p99
    %p101 = scmp.ne.s32.totalorder %s93, %s96
    %p102 = scmp.eq.s32.totalorder %s10, 0
    %p103 = por %p101, %p102
    %p104 = scmp.ne.s32.totalorder %s93, %s96
    %p105 = scmp.eq.s32.totalorder %s15, 1
    %p106 = por %p104, %p105
    %p107 = scmp.ne.s32.totalorder %s96, %s97
    %p108 = scmp.eq.s32.totalorder %s15, 0
    %p109 = por %p107, %p108
    %p110 = scmp.ne.s32.totalorder %s96, %s97
    %p111 = scmp.eq.s32.totalorder %s16, 1
    %p112 = por %p110, %p111
    %p114 = scmp.ne.s32.totalorder %s97, %s113
    %p115 = scmp.eq.s32.totalorder %s16, 0
    %p116 = por %p114, %p115
    %p117 = scmp.le.s32.totalorder 1, %s10
    %p118 = scmp.lt.s32.totalorder %s10, 3
    %p119 = pnand %p117, %p118
    %p120 = pneg %p119
    // Predicated region
    $region9: #{basic_3d_block_spatial.2} parent=5 // pred_check
      _
    $region10: #{basic_3d_block_spatial.2} parent=5 // pred_check_branch
      %122 = sbr.rel (%p119) target = $region12
    $region11: #{basic_3d_block_spatial.2} parent=5 // pred_region
      %s123 = ssub.s32 %s10, 1
      // Predicated region
      $region13: #{basic_3d_block_spatial.2} parent=11 // pred_check
        %p124 = pneg %p57
      $region14: #{basic_3d_block_spatial.2} parent=11 // pred_check_branch
        %126 = sbr.rel (%p124) target = $region16
      $region15: #{basic_3d_block_spatial.2} parent=11 // pred_region
        _
      $region16: #{basic_3d_block_spatial.2} parent=11 // pred_fallthru
        _
    $region12: #{basic_3d_block_spatial.2} parent=5 // pred_fallthru
      _
    %p127 = scmp.lt.s32.totalorder %s10, 2
    // Predicated region
    $region17: #{basic_3d_block_spatial.2} parent=5 // pred_check
      %p128 = pneg %p127
    $region18: #{basic_3d_block_spatial.2} parent=5 // pred_check_branch
      %130 = sbr.rel (%p128) target = $region20
    $region19: #{basic_3d_block_spatial.2} parent=5 // pred_region
      // Predicated region
      $region21: #{basic_3d_block_spatial.2} parent=19 // pred_check
        %p131 = pneg %p30
      $region22: #{basic_3d_block_spatial.2} parent=19 // pred_check_branch
        %133 = sbr.rel (%p131) target = $region24
      $region23: #{basic_3d_block_spatial.2} parent=19 // pred_region
        %s134 = smul.u32 3, %s10
        %p135 = scmp.lt.s32.totalorder %s134, 5
        %s136 = scalar_select %p135, %s134, 5
        %s137 = smul.addr %s136, 2
        %s138 = smul.addr %s137, 8
        %s139 = scalar_lea.vmem %s0, %s138
        %s140 = smul.u32 3, %s10
      $region24: #{basic_3d_block_spatial.2} parent=19 // pred_fallthru
        _
    $region20: #{basic_3d_block_spatial.2} parent=5 // pred_fallthru
      _
    %p141 = scmp.le.s32.totalorder 1, %s10
    %p142 = scmp.lt.s32.totalorder %s10, 3
    %p143 = pnand %p141, %p142
    %p144 = pneg %p143
    // Predicated region
    $region25: #{basic_3d_block_spatial.2} parent=5 // pred_check
      _
    $region26: #{basic_3d_block_spatial.2} parent=5 // pred_check_branch
      %146 = sbr.rel (%p143) target = $region28
    $region27: #{basic_3d_block_spatial.2} parent=5 // pred_region
      %s147 = ssub.s32 %s10, 1
      %s148 = smul.u32 3, %s15
      %p149 = scmp.lt.s32.totalorder %s148, 5
      %s150 = scalar_select %p149, %s148, 5
      %s151 = smul.addr %s150, 2
      %s152 = smul.addr %s151, 8
      %s153 = scalar_lea.vmem %s0, %s152
      %p154 = pneg %p36
      %p155 = pneg %p33
      %p156 = pneg %p57
      %p157 = pneg %p54
      %p158 = pneg %p83
      %p159 = pneg %p80
      %s160 = smul.u32 3, %s15
      %p161 = scmp.lt.s32.totalorder %s160, 5
      %s162 = scalar_select %p161, %s160, 5
      %s163 = smul.addr %s162, 2
      %s164 = smul.addr %s163, 8
      %s165 = scalar_lea.vmem %s2, %s164
      %p166 = pneg %p109
      %p167 = pneg %p106
      %p168 = scmp.lt.s32.totalorder %s15, 1
      %s169 = scalar_select %p168, %s15, 1
      %s170 = smul.addr %s169, 2
      %s171 = scalar_lea.vmem %s3, %s170
      %s172 = smul.u32 3, %s15
      %p173 = scmp.lt.s32.totalorder %s172, 5
      %s174 = scalar_select %p173, %s172, 5
      %s175 = smul.addr %s174, 2
      %s176 = smul.addr %s175, 8
      %s177 = scalar_lea.vmem %s0, %s176
      %s178 = smul.u32 3, %s15
      %s179 = smul.u32 3, %s15
      %p180 = scmp.lt.s32.totalorder %s179, 5
      %s181 = scalar_select %p180, %s179, 5
      %s182 = smul.addr %s181, 2
      %s183 = smul.addr %s182, 8
      %s184 = scalar_lea.vmem %s2, %s183
      %s185 = smul.u32 3, %s15
      %p186 = scmp.lt.s32.totalorder %s15, 1
      %s187 = scalar_select %p186, %s15, 1
      %s188 = smul.addr %s187, 2
      %s189 = scalar_lea.vmem %s3, %s188
      %v190 = vld [vmem:[%s177] sm:$0xff]
      %v191 = vld [vmem:[%s177 + $0x8] sm:$0xff]
      %v192 = vld [vmem:[%s177 + $0x10] sm:$0xff]
      %v193 = vld [vmem:[%s177 + $0x18] sm:$0xff]
      %v194 = vld [vmem:[%s177 + $0x20] sm:$0xff]
      %v195 = vld [vmem:[%s177 + $0x28] sm:$0xff]
      %202 = vrot.lane.b32.xlu0 %v190, 4
      %v203 = vpop.permute.xlu0 %202
      %204 = vrot.lane.b32.xlu0 %v191, 4
      %v205 = vpop.permute.xlu0 %204
      %206 = vrot.lane.b32.xlu0 %v192, 4
      %v207 = vpop.permute.xlu0 %206
      %208 = vrot.lane.b32.xlu0 %v193, 4
      %v209 = vpop.permute.xlu0 %208
      %210 = vrot.lane.b32.xlu0 %v194, 4
      %v211 = vpop.permute.xlu0 %210
      %212 = vrot.lane.b32.xlu0 %v195, 4
      %v213 = vpop.permute.xlu0 %212
      %vm220 = vcmask 31744
      %v221 = vsel %vm220, 0.0, %v203
      %v222 = vsel %vm220, 0.0, %v205
      %v223 = vsel %vm220, 0.0, %v207
      %v224 = vsel %vm220, 0.0, %v209
      %v225 = vsel %vm220, 0.0, %v211
      %v226 = vsel %vm220, 0.0, %v213
      %vm227 = vcmask 556032
      %v228 = vsel %vm227, %v221, 0.0
      %v229 = vsel %vm227, %v222, 0.0
      %v230 = vsel %vm227, %v223, 0.0
      %v231 = vsel %vm227, %v224, 0.0
      %v232 = vsel %vm227, %v225, 0.0
      %v233 = vsel %vm227, %v226, 0.0
      %vm240 = vcmask 1040384
      %v241 = vrot.slane %v228, 7
      %v242 = vrot.slane %v229, 7
      %v243 = vsel %vm240, %v241, %v242
      %v244 = vrot.slane %v230, 7
      %v245 = vrot.slane %v231, 7
      %v246 = vsel %vm240, %v244, %v245
      %v247 = vrot.slane %v232, 7
      %v248 = vrot.slane %v233, 7
      %v249 = vsel %vm240, %v247, %v248
      %v259 = vsel %vm240, 0.0, %v241
      %v260 = vsel %vm240, 0.0, %v244
      %v261 = vsel %vm240, 0.0, %v247
      %v262 = vsel %vm240, %v242, 0.0
      %v263 = vsel %vm240, %v245, 0.0
      %v264 = vsel %vm240, %v248, 0.0
      %vm271 = vcmask 1046528
      %v272 = vrot.slane %v259, 1
      %v273 = vrot.slane %v243, 1
      %v274 = vsel %vm271, %v272, %v273
      %v275 = vrot.slane %v262, 1
      %v276 = vsel %vm271, %v273, %v275
      %v277 = vrot.slane %v260, 1
      %v278 = vrot.slane %v246, 1
      %v279 = vsel %vm271, %v277, %v278
      %v280 = vrot.slane %v263, 1
      %v281 = vsel %vm271, %v278, %v280
      %v282 = vrot.slane %v261, 1
      %v283 = vrot.slane %v249, 1
      %v284 = vsel %vm271, %v282, %v283
      %v285 = vrot.slane %v264, 1
      %v286 = vsel %vm271, %v283, %v285
      %287 = vrot.lane.b32.xlu0 %v274, 72
      %v288 = vpop.permute.xlu0 %287
      %289 = vrot.lane.b32.xlu0 %v276, 72
      %v290 = vpop.permute.xlu0 %289
      %291 = vrot.lane.b32.xlu0 %v279, 72
      %v292 = vpop.permute.xlu0 %291
      %293 = vrot.lane.b32.xlu0 %v281, 72
      %v294 = vpop.permute.xlu0 %293
      %295 = vrot.lane.b32.xlu0 %v284, 72
      %v296 = vpop.permute.xlu0 %295
      %297 = vrot.lane.b32.xlu0 %v286, 72
      %v298 = vpop.permute.xlu0 %297
      %vm305 = vcmask 1045504
      %v306 = vrot.slane %v259, 2
      %v307 = vrot.slane %v243, 2
      %v308 = vsel %vm305, %v306, %v307
      %v309 = vrot.slane %v262, 2
      %v310 = vsel %vm305, %v307, %v309
      %v311 = vrot.slane %v260, 2
      %v312 = vrot.slane %v246, 2
      %v313 = vsel %vm305, %v311, %v312
      %v314 = vrot.slane %v263, 2
      %v315 = vsel %vm305, %v312, %v314
      %v316 = vrot.slane %v261, 2
      %v317 = vrot.slane %v249, 2
      %v318 = vsel %vm305, %v316, %v317
      %v319 = vrot.slane %v264, 2
      %v320 = vsel %vm305, %v317, %v319
      %321 = vrot.lane.b32.xlu0 %v308, 16
      %v322 = vpop.permute.xlu0 %321
      %323 = vrot.lane.b32.xlu0 %v310, 16
      %v324 = vpop.permute.xlu0 %323
      %325 = vrot.lane.b32.xlu0 %v313, 16
      %v326 = vpop.permute.xlu0 %325
      %327 = vrot.lane.b32.xlu0 %v315, 16
      %v328 = vpop.permute.xlu0 %327
      %329 = vrot.lane.b32.xlu0 %v318, 16
      %v330 = vpop.permute.xlu0 %329
      %331 = vrot.lane.b32.xlu0 %v320, 16
      %v332 = vpop.permute.xlu0 %331
      %vm339 = vcmask 588800
      %v340 = vsel %vm339, %v259, %v288
      %v341 = vsel %vm339, %v243, %v290
      %v342 = vsel %vm339, %v260, %v292
      %v343 = vsel %vm339, %v246, %v294
      %v344 = vsel %vm339, %v261, %v296
      %v345 = vsel %vm339, %v249, %v298
      %vm346 = vcmask 130048
      %v347 = vsel %vm346, %v288, %v322
      %v348 = vsel %vm346, %v290, %v324
      %v349 = vsel %vm346, %v292, %v326
      %v350 = vsel %vm346, %v294, %v328
      %v351 = vsel %vm346, %v296, %v330
      %v352 = vsel %vm346, %v298, %v332
      %v353 = vld [vmem:[%s1] sm:$0xff]
      %v354 = vld [vmem:[%s1 + $0x8] sm:$0xff]
      %v355 = vld [vmem:[%s1 + $0x10] sm:$0xff]
      %v356 = vld [vmem:[%s1 + $0x18] sm:$0xff]
      %v357 = vld [vmem:[%s1 + $0x20] sm:$0xff]
      %v358 = vld [vmem:[%s1 + $0x28] sm:$0xff]
      %v359 = vld [vmem:[%s1 + $0x30] sm:$0xff]
      %v360 = vld [vmem:[%s1 + $0x38] sm:$0xff]
      %v361 = vld [vmem:[%s1 + $0x40] sm:$0xff]
      %v362 = vld [vmem:[%s1 + $0x48] sm:$0xff]
      %v363 = vld [vmem:[%s1 + $0x50] sm:$0xff]
      %v364 = vld [vmem:[%s1 + $0x58] sm:$0xff]
      %v365 = vld [vmem:[%s1 + $0x60] sm:$0xff]
      %v366 = vld [vmem:[%s1 + $0x68] sm:$0xff]
      %v367 = vld [vmem:[%s1 + $0x70] sm:$0xff]
      %v368 = vld [vmem:[%s1 + $0x78] sm:$0xff]
      %v369 = vld [vmem:[%s1 + $0x80] sm:$0xff]
      %v370 = vld [vmem:[%s1 + $0x88] sm:$0xff]
      %v371 = vld [vmem:[%s1 + $0x90] sm:$0xff]
      %v372 = vld [vmem:[%s1 + $0x98] sm:$0xff]
      %v373 = vld [vmem:[%s1 + $0xa0] sm:$0xff]
      %v374 = vld [vmem:[%s1 + $0xa8] sm:$0xff]
      %v375 = vld [vmem:[%s1 + $0xb0] sm:$0xff]
      %v376 = vld [vmem:[%s1 + $0xb8] sm:$0xff]
      %v377 = vld [vmem:[%s1 + $0xc0] sm:$0xff]
      %v378 = vld [vmem:[%s1 + $0xc8] sm:$0xff]
      %v379 = vld [vmem:[%s1 + $0xd0] sm:$0xff]
      %vm380 = vcmask 719872
      %v382 = vsel %vm380, %v347, 0
      %v385 = vsel %vm380, %v348, 0
      %v388 = vsel %vm380, %v349, 0
      %v391 = vsel %vm380, %v350, 0
      %v394 = vsel %vm380, %v351, 0
      %v397 = vsel %vm380, %v352, 0
      %399 = vmatprep.subr.mxu0 0.0
      %400 = vmatpush1.msra.mxu0 %v353
      %401 = vmatprep.subr.mxu0 0.0
      %402 = vmatpush1.msra.mxu0 %v354
      %403 = vmatprep.subr.mxu0 0.0
      %404 = vmatpush1.msra.mxu0 %v355
      %405 = vmatprep.subr.mxu0 0.0
      %406 = vmatpush1.msra.mxu0 %v356
      %407 = vmatprep.subr.mxu0 0.0
      %408 = vmatpush1.msra.mxu0 %v357
      %409 = vmatprep.subr.mxu0 0.0
      %410 = vmatpush1.msra.mxu0 %v358
      %411 = vmatprep.subr.mxu0 0.0
      %412 = vmatpush1.msra.mxu0 %v359
      %413 = vmatprep.subr.mxu0 0.0
      %414 = vmatpush1.msra.mxu0 %v360
      %415 = vmatprep.subr.mxu0 0.0
      %416 = vmatpush1.msra.mxu0 %v361
      %417 = vmatprep.subr.mxu0 0.0
      %418 = vmatpush1.msra.mxu0 %v362
      %419 = vmatprep.subr.mxu0 0.0
      %420 = vmatpush1.msra.mxu0 %v363
      %421 = vmatprep.subr.mxu0 0.0
      %422 = vmatpush1.msra.mxu0 %v364
      %423 = vmatprep.subr.mxu0 0.0
      %424 = vmatpush1.msra.mxu0 %v365
      %425 = vmatprep.subr.mxu0 0.0
      %426 = vmatpush1.msra.mxu0 %v366
      %427 = vmatprep.subr.mxu0 0.0
      %428 = vmatpush1.msra.mxu0 %v367
      %429 = vmatprep.subr.mxu0 0.0
      %430 = vmatpush1.msra.mxu0 %v368
      %431 = vmatprep.subr.mxu0 0.0
      %432 = vmatpush1.msra.mxu0 %v369
      %433 = vmatprep.subr.mxu0 0.0
      %434 = vmatpush1.msra.mxu0 %v370
      %435 = vmatprep.subr.mxu0 0.0
      %436 = vmatpush1.msra.mxu0 %v371
      %437 = vmatprep.subr.mxu0 0.0
      %438 = vmatpush1.msra.mxu0 %v372
      %439 = vmatprep.subr.mxu0 0.0
      %440 = vmatpush1.msra.mxu0 %v373
      %441 = vmatprep.subr.mxu0 0.0
      %442 = vmatpush1.msra.mxu0 %v374
      %443 = vmatprep.subr.mxu0 0.0
      %444 = vmatpush1.msra.mxu0 %v375
      %445 = vmatprep.subr.mxu0 0.0
      %446 = vmatpush1.msra.mxu0 %v376
      %447 = vmatprep.subr.mxu0 0.0
      %448 = vmatpush1.msra.mxu0 %v377
      %449 = vmatprep.subr.mxu0 0.0
      %450 = vmatpush1.msra.mxu0 %v378
      %451 = vmatprep.subr.mxu0 0.0
      %452 = vmatpush1.msra.mxu0 %v379
      %453 = vmatprep.subr.mxu0 0.0
      %454 = vmatpush1.msra.mxu0 0.0
      %455 = vmatprep.subr.mxu0 0.0
      %456 = vmatpush1.msra.mxu0 0.0
      %457 = vmatprep.subr.mxu0 0.0
      %458 = vmatpush1.msra.mxu0 0.0
      %459 = vmatprep.subr.mxu0 0.0
      %460 = vmatpush1.msra.mxu0 0.0
      %461 = vmatprep.subr.mxu0 0.0
      %462 = vmatpush1.msra.mxu0 0.0
      %463 = vmatprep.mubr.f32.mxu0 %v382
      %464 = vmatmul.mubr.f32.gmra.mrb[0].mxu0 %v340
      %v465 = vpop.f32.mrb[0].mxu0
      %v466 = vadd.f32 0.0, %v465
      %v467 = vpop.f32.mrb[0].mxu0
      %468 = vmatprep.mubr.f32.mxu0 %v385
      %469 = vmatmul.mubr.f32.gmra.mrb[0].mxu0 %v341
      %v470 = vpop.f32.mrb[0].mxu0
      %v471 = vadd.f32 0.0, %v470
      %v472 = vpop.f32.mrb[0].mxu0
      %473 = vmatprep.mubr.f32.mxu0 %v388
      %474 = vmatmul.mubr.f32.gmra.mrb[0].mxu0 %v342
      %v475 = vpop.f32.mrb[0].mxu0
      %v476 = vadd.f32 0.0, %v475
      %v477 = vpop.f32.mrb[0].mxu0
      %478 = vmatprep.mubr.f32.mxu0 %v391
      %479 = vmatmul.mubr.f32.gmra.mrb[0].mxu0 %v343
      %v480 = vpop.f32.mrb[0].mxu0
      %v481 = vadd.f32 0.0, %v480
      %v482 = vpop.f32.mrb[0].mxu0
      %483 = vmatprep.mubr.f32.mxu0 %v394
      %484 = vmatmul.mubr.f32.gmra.mrb[0].mxu0 %v344
      %v485 = vpop.f32.mrb[0].mxu0
      %v486 = vadd.f32 0.0, %v485
      %v487 = vpop.f32.mrb[0].mxu0
      %488 = vmatprep.mubr.f32.mxu0 %v397
      %489 = vmatmul.mubr.f32.gmra.mrb[0].mxu0 %v345
      %v490 = vpop.f32.mrb[0].mxu0
      %v491 = vadd.f32 0.0, %v490
      %v492 = vpop.f32.mrb[0].mxu0
      %493 = vdwg.mxu0
      %494 = vst [vmem:[%s184] sm:$0xff] %v466
      %495 = vst [vmem:[%s184 + $0x8] sm:$0xff] %v471
      %496 = vst [vmem:[%s184 + $0x10] sm:$0xff] %v476
      %497 = vst [vmem:[%s184 + $0x18] sm:$0xff] %v481
      %498 = vst [vmem:[%s184 + $0x20] sm:$0xff] %v486
      %499 = vst [vmem:[%s184 + $0x28] sm:$0xff] %v491
      %v500 = vadd.f32 %v466, %v471
      %v501 = vadd.f32 %v500, %v476
      %v502 = vadd.f32 %v501, %v481
      %v503 = vadd.f32 %v502, %v486
      %v504 = vadd.f32 %v503, %v491
      %v505 = vrot.slane %v504, 4
      %v506 = vadd.f32 %v504, %v505
      %v507 = vrot.slane %v506, 2
      %v508 = vadd.f32 %v506, %v507
      %v509 = vrot.slane %v508, 1
      %v510 = vadd.f32 %v508, %v509
      %v511 = vmul.f32 %v466, %v466
      %v512 = vmul.f32 %v471, %v471
      %v513 = vmul.f32 %v476, %v476
      %v514 = vmul.f32 %v481, %v481
      %v515 = vmul.f32 %v486, %v486
      %v516 = vmul.f32 %v491, %v491
      %v517 = vadd.f32 %v511, %v512
      %v518 = vadd.f32 %v517, %v513
      %v519 = vadd.f32 %v518, %v514
      %v520 = vadd.f32 %v519, %v515
      %v521 = vadd.f32 %v520, %v516
      %v522 = vrot.slane %v521, 4
      %v523 = vadd.f32 %v521, %v522
      %v524 = vrot.slane %v523, 2
      %v525 = vadd.f32 %v523, %v524
      %v526 = vrot.slane %v525, 1
      %v527 = vadd.f32 %v525, %v526
      %v528 = vsel %vm240, %v510, %v527
      %529 = vst [vmem:[%s189] sm:$0x3] %v528
      %s530 = smul.u32 3, %s15
      %p531 = scmp.lt.s32.totalorder %s530, 5
      %s532 = scalar_select %p531, %s530, 5
      %s533 = smul.addr %s532, 2
      %s534 = smul.addr %s533, 8
      %s535 = scalar_lea.vmem %s2, %s534
      %p536 = scmp.lt.s32.totalorder %s15, 1
      %s537 = scalar_select %p536, %s15, 1
      %s538 = smul.addr %s537, 2
      %s539 = scalar_lea.vmem %s3, %s538
      // Predicated region
      $region29: #{basic_3d_block_spatial.2} parent=27 // pred_check
        %p540 = pneg %p80
      $region30: #{basic_3d_block_spatial.2} parent=27 // pred_check_branch
        %542 = sbr.rel (%p540) target = $region32
      $region31: #{basic_3d_block_spatial.2} parent=27 // pred_region
        %s543 = smul.u32 3, %s15
      $region32: #{basic_3d_block_spatial.2} parent=27 // pred_fallthru
        _
      // Predicated region
      $region33: #{basic_3d_block_spatial.2} parent=27 // pred_check
        %p544 = pneg %p106
      $region34: #{basic_3d_block_spatial.2} parent=27 // pred_check_branch
        %546 = sbr.rel (%p544) target = $region36
      $region35: #{basic_3d_block_spatial.2} parent=27 // pred_region
        _
      $region36: #{basic_3d_block_spatial.2} parent=27 // pred_fallthru
        _
    $region28: #{basic_3d_block_spatial.2} parent=5 // pred_fallthru
      _
    %p547 = scmp.le.s32.totalorder 2, %s10
    // Predicated region
    $region37: #{basic_3d_block_spatial.2} parent=5 // pred_check
      %p548 = pneg %p547
    $region38: #{basic_3d_block_spatial.2} parent=5 // pred_check_branch
      %550 = sbr.rel (%p548) target = $region40
    $region39: #{basic_3d_block_spatial.2} parent=5 // pred_region
      %s551 = ssub.s32 %s10, 2
      // Predicated region
      $region41: #{basic_3d_block_spatial.2} parent=39 // pred_check
        %p552 = pneg %p86
      $region42: #{basic_3d_block_spatial.2} parent=39 // pred_check_branch
        %554 = sbr.rel (%p552) target = $region44
      $region43: #{basic_3d_block_spatial.2} parent=39 // pred_region
        %s555 = smul.u32 3, %s16
        %p556 = scmp.lt.s32.totalorder %s555, 5
        %s557 = scalar_select %p556, %s555, 5
        %s558 = smul.addr %s557, 2
        %s559 = smul.addr %s558, 8
        %s560 = scalar_lea.vmem %s2, %s559
      $region44: #{basic_3d_block_spatial.2} parent=39 // pred_fallthru
        _
      // Predicated region
      $region45: #{basic_3d_block_spatial.2} parent=39 // pred_check
        %p561 = pneg %p112
      $region46: #{basic_3d_block_spatial.2} parent=39 // pred_check_branch
        %563 = sbr.rel (%p561) target = $region48
      $region47: #{basic_3d_block_spatial.2} parent=39 // pred_region
        %p564 = scmp.lt.s32.totalorder %s16, 1
        %s565 = scalar_select %p564, %s16, 1
        %s566 = smul.addr %s565, 2
        %s567 = scalar_lea.vmem %s3, %s566
      $region48: #{basic_3d_block_spatial.2} parent=39 // pred_fallthru
        _
    $region40: #{basic_3d_block_spatial.2} parent=5 // pred_fallthru
      _
  $region6: #{basic_3d_block_spatial.2} parent=0 // loop_footer
    %s14 = sadd.s32 1, %s10
  $region7: #{basic_3d_block_spatial.2} parent=0 // loop_footer_branch
    %9 = sbr.rel target = $region3
  $region8: #{basic_3d_block_spatial.2} parent=0 // loop_exit
    _

// kernel: basic_3d_block_spatial.3
$region0: #{basic_3d_block_spatial.3}
  #allocation0 [shape = 'u32[]', space=smem, size = 0x4, offset = 0x4, fixed_abs, tag = 'smem constant byte address 0x4 - core index']
  #allocation1 [shape = 'u32[144,128]{1,0:T(1,128)}', space=vmem, size = 0x12000, scoped, tag = 'internal scratch']
  %s0 = inlined_call_operand.vmem [shape: f32[6,16,128], index: 0, kind: input, shape index: {}]
  %s1 = inlined_call_operand.vmem [shape: f32[1,128], index: 1, kind: input, shape index: {}]
  %s2 = inlined_call_operand.vmem [shape: f32[1,128], index: 2, kind: input, shape index: {}]
  %s3 = inlined_call_operand.vmem [shape: f32[432,128], index: 3, kind: input, shape index: {}]
  %s4 = inlined_call_operand.vmem [shape: f32[6,16,128], index: 4, kind: output, shape index: {0}]
  %s5 = inlined_call_operand.vmem [shape: f32[2,2,128], index: 5, kind: output, shape index: {1}]
  %6 = xla_tuple %s4, %s5
  %s7 = sld [smem:[#allocation0]]
  $region57: #{basic_3d_block_spatial.3} parent=0
    _
  %s9 = ssub.s32 1, %s7
  %s10 = scalar_select 0, %s9, %s7
  loop: start=0, step=1, limit=4
  $region2: #{basic_3d_block_spatial.3} parent=0 // loop_pre_header
    _
  $region3: #{basic_3d_block_spatial.3} parent=0 // loop_header
    %s12 = sphi 0, %s16
    %p13 = scmp.ge.s32.totalorder %s12, 4
    %s22 = sphi 0, %s24
    %s25 = sphi 0, %s22
    %s26 = sphi 0, %s25
    %s42 = sphi 0, %s26
    %s46 = sphi 0, %s46
    %s48 = sphi 0, %s46
    %s49 = sphi 0, %s48
    %s63 = sphi 0, %s49
    %s67 = sphi 0, %s67
    %s69 = sphi 0, %s67
    %s70 = sphi 0, %s69
    %s84 = sphi 0, %s70
    %s88 = sphi 0, %s88
    %s90 = sphi 0, %s88
    %s91 = sphi 0, %s90
    %s105 = sphi 0, %s91
    %s111 = sphi 0, %s113
    %s114 = sphi 0, %s111
    %s115 = sphi 0, %s114
    %s131 = sphi 0, %s115
    %s137 = sphi 0, %s139
    %s140 = sphi 0, %s137
    %s141 = sphi 0, %s140
    %s157 = sphi 0, %s141
  $region4: #{basic_3d_block_spatial.3} parent=0 // loop_header_branch
    %15 = sbr.rel (%p13) target = $region8
  $region5: #{basic_3d_block_spatial.3} parent=0 // loop_body
    %s17 = ssub.s32 %s12, 1
    %s18 = ssub.s32 %s12, 2
    %s19 = sadd.s32 %s12, 1
    %s20 = ssub.s32 %s12, %s19
    %p21 = scmp.eq.s32.totalorder %s20, 0
    %s23 = sadd.s32 %s22, 1
    %s24 = scalar_select %p21, %s22, %s23
    %p27 = pneg %p21
    %p28 = scmp.eq.s32.totalorder %s12, 1
    %p29 = por %p27, %p28
    %p30 = scmp.ne.s32.totalorder %s22, %s25
    %p31 = scmp.eq.s32.totalorder %s12, 0
    %p32 = por %p30, %p31
    %p33 = scmp.ne.s32.totalorder %s22, %s25
    %p34 = scmp.eq.s32.totalorder %s17, 1
    %p35 = por %p33, %p34
    %p36 = scmp.ne.s32.totalorder %s25, %s26
    %p37 = scmp.eq.s32.totalorder %s17, 0
    %p38 = por %p36, %p37
    %p39 = scmp.ne.s32.totalorder %s25, %s26
    %p40 = scmp.eq.s32.totalorder %s18, 1
    %p41 = por %p39, %p40
    %p43 = scmp.ne.s32.totalorder %s26, %s42
    %p44 = scmp.eq.s32.totalorder %s18, 0
    %p45 = por %p43, %p44
    %s47 = sadd.s32 %s46, 1
    %p50 = scmp.eq.s32.totalorder %s12, 1
    %p51 = scmp.ne.s32.totalorder %s46, %s48
    %p52 = scmp.eq.s32.totalorder %s12, 0
    %p53 = por %p51, %p52
    %p54 = scmp.ne.s32.totalorder %s46, %s48
    %p55 = scmp.eq.s32.totalorder %s17, 1
    %p56 = por %p54, %p55
    %p57 = scmp.ne.s32.totalorder %s48, %s49
    %p58 = scmp.eq.s32.totalorder %s17, 0
    %p59 = por %p57, %p58
    %p60 = scmp.ne.s32.totalorder %s48, %s49
    %p61 = scmp.eq.s32.totalorder %s18, 1
    %p62 = por %p60, %p61
    %p64 = scmp.ne.s32.totalorder %s49, %s63
    %p65 = scmp.eq.s32.totalorder %s18, 0
    %p66 = por %p64, %p65
    %s68 = sadd.s32 %s67, 1
    %p71 = scmp.eq.s32.totalorder %s12, 1
    %p72 = scmp.ne.s32.totalorder %s67, %s69
    %p73 = scmp.eq.s32.totalorder %s12, 0
    %p74 = por %p72, %p73
    %p75 = scmp.ne.s32.totalorder %s67, %s69
    %p76 = scmp.eq.s32.totalorder %s17, 1
    %p77 = por %p75, %p76
    %p78 = scmp.ne.s32.totalorder %s69, %s70
    %p79 = scmp.eq.s32.totalorder %s17, 0
    %p80 = por %p78, %p79
    %p81 = scmp.ne.s32.totalorder %s69, %s70
    %p82 = scmp.eq.s32.totalorder %s18, 1
    %p83 = por %p81, %p82
    %p85 = scmp.ne.s32.totalorder %s70, %s84
    %p86 = scmp.eq.s32.totalorder %s18, 0
    %p87 = por %p85, %p86
    %s89 = sadd.s32 %s88, 1
    %p92 = scmp.eq.s32.totalorder %s12, 1
    %p93 = scmp.ne.s32.totalorder %s88, %s90
    %p94 = scmp.eq.s32.totalorder %s12, 0
    %p95 = por %p93, %p94
    %p96 = scmp.ne.s32.totalorder %s88, %s90
    %p97 = scmp.eq.s32.totalorder %s17, 1
    %p98 = por %p96, %p97
    %p99 = scmp.ne.s32.totalorder %s90, %s91
    %p100 = scmp.eq.s32.totalorder %s17, 0
    %p101 = por %p99, %p100
    %p102 = scmp.ne.s32.totalorder %s90, %s91
    %p103 = scmp.eq.s32.totalorder %s18, 1
    %p104 = por %p102, %p103
    %p106 = scmp.ne.s32.totalorder %s91, %s105
    %p107 = scmp.eq.s32.totalorder %s18, 0
    %p108 = por %p106, %p107
    %s109 = ssub.s32 %s12, %s19
    %p110 = scmp.eq.s32.totalorder %s109, 0
    %s112 = sadd.s32 %s111, 1
    %s113 = scalar_select %p110, %s111, %s112
    %p116 = pneg %p110
    %p117 = scmp.eq.s32.totalorder %s12, 1
    %p118 = por %p116, %p117
    %p119 = scmp.ne.s32.totalorder %s111, %s114
    %p120 = scmp.eq.s32.totalorder %s12, 0
    %p121 = por %p119, %p120
    %p122 = scmp.ne.s32.totalorder %s111, %s114
    %p123 = scmp.eq.s32.totalorder %s17, 1
    %p124 = por %p122, %p123
    %p125 = scmp.ne.s32.totalorder %s114, %s115
    %p126 = scmp.eq.s32.totalorder %s17, 0
    %p127 = por %p125, %p126
    %p128 = scmp.ne.s32.totalorder %s114, %s115
    %p129 = scmp.eq.s32.totalorder %s18, 1
    %p130 = por %p128, %p129
    %p132 = scmp.ne.s32.totalorder %s115, %s131
    %p133 = scmp.eq.s32.totalorder %s18, 0
    %p134 = por %p132, %p133
    %s135 = ssub.s32 %s12, %s19
    %p136 = scmp.eq.s32.totalorder %s135, 0
    %s138 = sadd.s32 %s137, 1
    %s139 = scalar_select %p136, %s137, %s138
    %p142 = pneg %p136
    %p143 = scmp.eq.s32.totalorder %s12, 1
    %p144 = por %p142, %p143
    %p145 = scmp.ne.s32.totalorder %s137, %s140
    %p146 = scmp.eq.s32.totalorder %s12, 0
    %p147 = por %p145, %p146
    %p148 = scmp.ne.s32.totalorder %s137, %s140
    %p149 = scmp.eq.s32.totalorder %s17, 1
    %p150 = por %p148, %p149
    %p151 = scmp.ne.s32.totalorder %s140, %s141
    %p152 = scmp.eq.s32.totalorder %s17, 0
    %p153 = por %p151, %p152
    %p154 = scmp.ne.s32.totalorder %s140, %s141
    %p155 = scmp.eq.s32.totalorder %s18, 1
    %p156 = por %p154, %p155
    %p158 = scmp.ne.s32.totalorder %s141, %s157
    %p159 = scmp.eq.s32.totalorder %s18, 0
    %p160 = por %p158, %p159
    %p161 = scmp.le.s32.totalorder 1, %s12
    %p162 = scmp.lt.s32.totalorder %s12, 3
    %p163 = pnand %p161, %p162
    %p164 = pneg %p163
    // Predicated region
    $region9: #{basic_3d_block_spatial.3} parent=5 // pred_check
      _
    $region10: #{basic_3d_block_spatial.3} parent=5 // pred_check_branch
      %166 = sbr.rel (%p163) target = $region12
    $region11: #{basic_3d_block_spatial.3} parent=5 // pred_region
      %s167 = ssub.s32 %s12, 1
      // Predicated region
      $region13: #{basic_3d_block_spatial.3} parent=11 // pred_check
        %p168 = pneg %p59
      $region14: #{basic_3d_block_spatial.3} parent=11 // pred_check_branch
        %170 = sbr.rel (%p168) target = $region16
      $region15: #{basic_3d_block_spatial.3} parent=11 // pred_region
        _
      $region16: #{basic_3d_block_spatial.3} parent=11 // pred_fallthru
        _
      // Predicated region
      $region17: #{basic_3d_block_spatial.3} parent=11 // pred_check
        %p171 = pneg %p80
      $region18: #{basic_3d_block_spatial.3} parent=11 // pred_check_branch
        %173 = sbr.rel (%p171) target = $region20
      $region19: #{basic_3d_block_spatial.3} parent=11 // pred_region
        _
      $region20: #{basic_3d_block_spatial.3} parent=11 // pred_fallthru
        _
      // Predicated region
      $region21: #{basic_3d_block_spatial.3} parent=11 // pred_check
        %p174 = pneg %p101
      $region22: #{basic_3d_block_spatial.3} parent=11 // pred_check_branch
        %176 = sbr.rel (%p174) target = $region24
      $region23: #{basic_3d_block_spatial.3} parent=11 // pred_region
        _
      $region24: #{basic_3d_block_spatial.3} parent=11 // pred_fallthru
        _
    $region12: #{basic_3d_block_spatial.3} parent=5 // pred_fallthru
      _
    %p177 = scmp.lt.s32.totalorder %s12, 2
    // Predicated region
    $region25: #{basic_3d_block_spatial.3} parent=5 // pred_check
      %p178 = pneg %p177
    $region26: #{basic_3d_block_spatial.3} parent=5 // pred_check_branch
      %180 = sbr.rel (%p178) target = $region28
    $region27: #{basic_3d_block_spatial.3} parent=5 // pred_region
      // Predicated region
      $region29: #{basic_3d_block_spatial.3} parent=27 // pred_check
        %p181 = pneg %p32
      $region30: #{basic_3d_block_spatial.3} parent=27 // pred_check_branch
        %183 = sbr.rel (%p181) target = $region32
      $region31: #{basic_3d_block_spatial.3} parent=27 // pred_region
        %s184 = smul.u32 3, %s12
        %p185 = scmp.lt.s32.totalorder %s184, 5
        %s186 = scalar_select %p185, %s184, 5
        %s187 = smul.addr %s186, 2
        %s188 = smul.addr %s187, 8
        %s189 = scalar_lea.vmem %s0, %s188
        %s190 = smul.u32 3, %s12
      $region32: #{basic_3d_block_spatial.3} parent=27 // pred_fallthru
        _
    $region28: #{basic_3d_block_spatial.3} parent=5 // pred_fallthru
      _
    %p191 = scmp.le.s32.totalorder 1, %s12
    %p192 = scmp.lt.s32.totalorder %s12, 3
    %p193 = pnand %p191, %p192
    %p194 = pneg %p193
    // Predicated region
    $region33: #{basic_3d_block_spatial.3} parent=5 // pred_check
      _
    $region34: #{basic_3d_block_spatial.3} parent=5 // pred_check_branch
      %196 = sbr.rel (%p193) target = $region36
    $region35: #{basic_3d_block_spatial.3} parent=5 // pred_region
      %s197 = ssub.s32 %s12, 1
      %s198 = smul.u32 3, %s17
      %p199 = scmp.lt.s32.totalorder %s198, 5
      %s200 = scalar_select %p199, %s198, 5
      %s201 = smul.addr %s200, 2
      %s202 = smul.addr %s201, 8
      %s203 = scalar_lea.vmem %s0, %s202
      %p204 = pneg %p38
      %p205 = pneg %p35
      %p206 = pneg %p59
      %p207 = pneg %p56
      %p208 = pneg %p80
      %p209 = pneg %p77
      %p210 = pneg %p101
      %p211 = pneg %p98
      %p212 = pneg %p127
      %p213 = pneg %p124
      %s214 = smul.u32 3, %s17
      %p215 = scmp.lt.s32.totalorder %s214, 5
      %s216 = scalar_select %p215, %s214, 5
      %s217 = smul.addr %s216, 2
      %s218 = smul.addr %s217, 8
      %s219 = scalar_lea.vmem %s4, %s218
      %p220 = pneg %p153
      %p221 = pneg %p150
      %p222 = scmp.lt.s32.totalorder %s17, 1
      %s223 = scalar_select %p222, %s17, 1
      %s224 = smul.addr %s223, 2
      %s225 = scalar_lea.vmem %s5, %s224
      %s226 = smul.u32 3, %s17
      %p227 = scmp.lt.s32.totalorder %s226, 5
      %s228 = scalar_select %p227, %s226, 5
      %s229 = smul.addr %s228, 2
      %s230 = smul.addr %s229, 8
      %s231 = scalar_lea.vmem %s0, %s230
      %s232 = smul.u32 3, %s17
      %s233 = smul.u32 3, %s17
      %p234 = scmp.lt.s32.totalorder %s233, 5
      %s235 = scalar_select %p234, %s233, 5
      %s236 = smul.addr %s235, 2
      %s237 = smul.addr %s236, 8
      %s238 = scalar_lea.vmem %s4, %s237
      %s239 = smul.u32 3, %s17
      %p240 = scmp.lt.s32.totalorder %s17, 1
      %s241 = scalar_select %p240, %s17, 1
      %s242 = smul.addr %s241, 2
      %s243 = scalar_lea.vmem %s5, %s242
      %v244 = vld [vmem:[%s231] sm:$0xff]
      %v245 = vld [vmem:[%s231 + $0x8] sm:$0xff]
      %v246 = vld [vmem:[%s231 + $0x10] sm:$0xff]
      %v247 = vld [vmem:[%s231 + $0x18] sm:$0xff]
      %v248 = vld [vmem:[%s231 + $0x20] sm:$0xff]
      %v249 = vld [vmem:[%s231 + $0x28] sm:$0xff]
      %v250 = vld [vmem:[%s1] sm:$0x1]
      %v252 = vlaneseq
      %v253 = vshrl.u32 %v252, 7
      %v254 = vsub.s32 0, %v253
      %v255 = vrot.slane %v250, %v254
      %v257 = vmul.f32 %v244, %v255
      %v258 = vmul.f32 %v245, %v255
      %v259 = vmul.f32 %v246, %v255
      %v260 = vmul.f32 %v247, %v255
      %v261 = vmul.f32 %v248, %v255
      %v262 = vmul.f32 %v249, %v255
      %v263 = vld [vmem:[%s2] sm:$0x1]
      %v265 = vlaneseq
      %v266 = vshrl.u32 %v265, 7
      %v267 = vsub.s32 0, %v266
      %v268 = vrot.slane %v263, %v267
      %v270 = vadd.f32 %v257, %v268
      %v271 = vadd.f32 %v258, %v268
      %v272 = vadd.f32 %v259, %v268
      %v273 = vadd.f32 %v260, %v268
      %v274 = vadd.f32 %v261, %v268
      %v275 = vadd.f32 %v262, %v268
      %v276 = vmax.f32 %v270, 0.0
      %v277 = vmax.f32 %v271, 0.0
      %v278 = vmax.f32 %v272, 0.0
      %v279 = vmax.f32 %v273, 0.0
      %v280 = vmax.f32 %v274, 0.0
      %v281 = vmax.f32 %v275, 0.0
      %288 = vrot.lane.b32.xlu0 %v276, 8
      %v289 = vpop.permute.xlu0 %288
      %290 = vrot.lane.b32.xlu0 %v277, 8
      %v291 = vpop.permute.xlu0 %290
      %292 = vrot.lane.b32.xlu0 %v278, 8
      %v293 = vpop.permute.xlu0 %292
      %294 = vrot.lane.b32.xlu0 %v279, 8
      %v295 = vpop.permute.xlu0 %294
      %296 = vrot.lane.b32.xlu0 %v280, 8
      %v297 = vpop.permute.xlu0 %296
      %298 = vrot.lane.b32.xlu0 %v281, 8
      %v299 = vpop.permute.xlu0 %298
      %vm306 = vcmask 64512
      %v307 = vsel %vm306, 0.0, %v289
      %v308 = vsel %vm306, 0.0, %v291
      %v309 = vsel %vm306, 0.0, %v293
      %v310 = vsel %vm306, 0.0, %v295
      %v311 = vsel %vm306, 0.0, %v297
      %v312 = vsel %vm306, 0.0, %v299
      %v313 = vsel %vm306, %v289, 0.0
      %v314 = vsel %vm306, %v291, 0.0
      %v315 = vsel %vm306, %v293, 0.0
      %v316 = vsel %vm306, %v295, 0.0
      %v317 = vsel %vm306, %v297, 0.0
      %v318 = vsel %vm306, %v299, 0.0
      %vm331 = vcmask 1040384
      %v332 = vrot.slane %v307, 7
      %v333 = vrot.slane %v313, 7
      %v334 = vrot.slane %v308, 7
      %v335 = vsel %vm331, %v332, %v334
      %v336 = vrot.slane %v314, 7
      %v337 = vsel %vm331, %v333, %v336
      %v338 = vrot.slane %v309, 7
      %v339 = vrot.slane %v315, 7
      %v340 = vrot.slane %v310, 7
      %v341 = vsel %vm331, %v338, %v340
      %v342 = vrot.slane %v316, 7
      %v343 = vsel %vm331, %v339, %v342
      %v344 = vrot.slane %v311, 7
      %v345 = vrot.slane %v317, 7
      %v346 = vrot.slane %v312, 7
      %v347 = vsel %vm331, %v344, %v346
      %v348 = vrot.slane %v318, 7
      %v349 = vsel %vm331, %v345, %v348
      %v368 = vsel %vm331, 0.0, %v332
      %v369 = vsel %vm331, 0.0, %v333
      %v370 = vsel %vm331, 0.0, %v338
      %v371 = vsel %vm331, 0.0, %v339
      %v372 = vsel %vm331, 0.0, %v344
      %v373 = vsel %vm331, 0.0, %v345
      %v374 = vsel %vm331, %v334, 0.0
      %v375 = vsel %vm331, %v336, 0.0
      %v376 = vsel %vm331, %v340, 0.0
      %v377 = vsel %vm331, %v342, 0.0
      %v378 = vsel %vm331, %v346, 0.0
      %v379 = vsel %vm331, %v348, 0.0
      %vm392 = vcmask 1046528
      %v393 = vrot.slane %v368, 1
      %v394 = vrot.slane %v335, 1
      %v395 = vsel %vm392, %v393, %v394
      %v396 = vrot.slane %v369, 1
      %v397 = vrot.slane %v337, 1
      %v398 = vsel %vm392, %v396, %v397
      %v399 = vrot.slane %v374, 1
      %v400 = vsel %vm392, %v394, %v399
      %v401 = vrot.slane %v375, 1
      %v402 = vsel %vm392, %v397, %v401
      %v403 = vrot.slane %v370, 1
      %v404 = vrot.slane %v341, 1
      %v405 = vsel %vm392, %v403, %v404
      %v406 = vrot.slane %v371, 1
      %v407 = vrot.slane %v343, 1
      %v408 = vsel %vm392, %v406, %v407
      %v409 = vrot.slane %v376, 1
      %v410 = vsel %vm392, %v404, %v409
      %v411 = vrot.slane %v377, 1
      %v412 = vsel %vm392, %v407, %v411
      %v413 = vrot.slane %v372, 1
      %v414 = vrot.slane %v347, 1
      %v415 = vsel %vm392, %v413, %v414
      %v416 = vrot.slane %v373, 1
      %v417 = vrot.slane %v349, 1
      %v418 = vsel %vm392, %v416, %v417
      %v419 = vrot.slane %v378, 1
      %v420 = vsel %vm392, %v414, %v419
      %v421 = vrot.slane %v379, 1
      %v422 = vsel %vm392, %v417, %v421
      %423 = vrot.lane.b32.xlu0 %v395, 16
      %v424 = vpop.permute.xlu0 %423
      %425 = vrot.lane.b32.xlu0 %v398, 16
      %v426 = vpop.permute.xlu0 %425
      %427 = vrot.lane.b32.xlu0 %v400, 16
      %v428 = vpop.permute.xlu0 %427
      %429 = vrot.lane.b32.xlu0 %v402, 16
      %v430 = vpop.permute.xlu0 %429
      %431 = vrot.lane.b32.xlu0 %v405, 16
      %v432 = vpop.permute.xlu0 %431
      %433 = vrot.lane.b32.xlu0 %v408, 16
      %v434 = vpop.permute.xlu0 %433
      %435 = vrot.lane.b32.xlu0 %v410, 16
      %v436 = vpop.permute.xlu0 %435
      %437 = vrot.lane.b32.xlu0 %v412, 16
      %v438 = vpop.permute.xlu0 %437
      %439 = vrot.lane.b32.xlu0 %v415, 16
      %v440 = vpop.permute.xlu0 %439
      %441 = vrot.lane.b32.xlu0 %v418, 16
      %v442 = vpop.permute.xlu0 %441
      %443 = vrot.lane.b32.xlu0 %v420, 16
      %v444 = vpop.permute.xlu0 %443
      %445 = vrot.lane.b32.xlu0 %v422, 16
      %v446 = vpop.permute.xlu0 %445
      %vm447 = vcmask 130048
      %v448 = vsel %vm447, %v424, %v426
      %v449 = vsel %vm447, %v428, %v430
      %v450 = vsel %vm447, %v432, %v434
      %v451 = vsel %vm447, %v436, %v438
      %v452 = vsel %vm447, %v440, %v442
      %v453 = vsel %vm447, %v444, %v446
      %vm466 = vcmask 1045504
      %v467 = vrot.slane %v368, 2
      %v468 = vrot.slane %v335, 2
      %v469 = vsel %vm466, %v467, %v468
      %v470 = vrot.slane %v369, 2
      %v471 = vrot.slane %v337, 2
      %v472 = vsel %vm466, %v470, %v471
      %v473 = vrot.slane %v374, 2
      %v474 = vsel %vm466, %v468, %v473
      %v475 = vrot.slane %v375, 2
      %v476 = vsel %vm466, %v471, %v475
      %v477 = vrot.slane %v370, 2
      %v478 = vrot.slane %v341, 2
      %v479 = vsel %vm466, %v477, %v478
      %v480 = vrot.slane %v371, 2
      %v481 = vrot.slane %v343, 2
      %v482 = vsel %vm466, %v480, %v481
      %v483 = vrot.slane %v376, 2
      %v484 = vsel %vm466, %v478, %v483
      %v485 = vrot.slane %v377, 2
      %v486 = vsel %vm466, %v481, %v485
      %v487 = vrot.slane %v372, 2
      %v488 = vrot.slane %v347, 2
      %v489 = vsel %vm466, %v487, %v488
      %v490 = vrot.slane %v373, 2
      %v491 = vrot.slane %v349, 2
      %v492 = vsel %vm466, %v490, %v491
      %v493 = vrot.slane %v378, 2
      %v494 = vsel %vm466, %v488, %v493
      %v495 = vrot.slane %v379, 2
      %v496 = vsel %vm466, %v491, %v495
      %497 = vrot.lane.b32.xlu0 %v469, 32
      %v498 = vpop.permute.xlu0 %497
      %499 = vrot.lane.b32.xlu0 %v472, 32
      %v500 = vpop.permute.xlu0 %499
      %501 = vrot.lane.b32.xlu0 %v474, 32
      %v502 = vpop.permute.xlu0 %501
      %503 = vrot.lane.b32.xlu0 %v476, 32
      %v504 = vpop.permute.xlu0 %503
      %505 = vrot.lane.b32.xlu0 %v479, 32
      %v506 = vpop.permute.xlu0 %505
      %507 = vrot.lane.b32.xlu0 %v482, 32
      %v508 = vpop.permute.xlu0 %507
      %509 = vrot.lane.b32.xlu0 %v484, 32
      %v510 = vpop.permute.xlu0 %509
      %511 = vrot.lane.b32.xlu0 %v486, 32
      %v512 = vpop.permute.xlu0 %511
      %513 = vrot.lane.b32.xlu0 %v489, 32
      %v514 = vpop.permute.xlu0 %513
      %515 = vrot.lane.b32.xlu0 %v492, 32
      %v516 = vpop.permute.xlu0 %515
      %517 = vrot.lane.b32.xlu0 %v494, 32
      %v518 = vpop.permute.xlu0 %517
      %519 = vrot.lane.b32.xlu0 %v496, 32
      %v520 = vpop.permute.xlu0 %519
      %vm521 = vcmask 261120
      %v522 = vsel %vm521, %v498, %v500
      %v523 = vsel %vm521, %v502, %v504
      %v524 = vsel %vm521, %v506, %v508
      %v525 = vsel %vm521, %v510, %v512
      %v526 = vsel %vm521, %v514, %v516
      %v527 = vsel %vm521, %v518, %v520
      %v534 = vsel %vm447, %v369, %v424
      %v535 = vsel %vm447, %v337, %v428
      %v536 = vsel %vm447, %v371, %v432
      %v537 = vsel %vm447, %v343, %v436
      %v538 = vsel %vm447, %v373, %v440
      %v539 = vsel %vm447, %v349, %v444
      %v540 = vsel %vm521, %v448, %v498
      %v541 = vsel %vm521, %v449, %v502
      %v542 = vsel %vm521, %v450, %v506
      %v543 = vsel %vm521, %v451, %v510
      %v544 = vsel %vm521, %v452, %v514
      %v545 = vsel %vm521, %v453, %v518
      %v546 = vld [vmem:[%s3] sm:$0xff]
      %v547 = vld [vmem:[%s3 + $0x8] sm:$0xff]
      %v548 = vld [vmem:[%s3 + $0x10] sm:$0xff]
      %v549 = vld [vmem:[%s3 + $0x18] sm:$0xff]
      %v550 = vld [vmem:[%s3 + $0x20] sm:$0xff]
      %v551 = vld [vmem:[%s3 + $0x28] sm:$0xff]
      %v552 = vld [vmem:[%s3 + $0x30] sm:$0xff]
      %v553 = vld [vmem:[%s3 + $0x38] sm:$0xff]
      %v554 = vld [vmem:[%s3 + $0x40] sm:$0xff]
      %v555 = vld [vmem:[%s3 + $0x48] sm:$0xff]
      %v556 = vld [vmem:[%s3 + $0x50] sm:$0xff]
      %v557 = vld [vmem:[%s3 + $0x58] sm:$0xff]
      %v558 = vld [vmem:[%s3 + $0x60] sm:$0xff]
      %v559 = vld [vmem:[%s3 + $0x68] sm:$0xff]
      %v560 = vld [vmem:[%s3 + $0x70] sm:$0xff]
      %v561 = vld [vmem:[%s3 + $0x78] sm:$0xff]
      %v562 = vld [vmem:[%s3 + $0x80] sm:$0xff]
      %v563 = vld [vmem:[%s3 + $0x88] sm:$0xff]
      %v564 = vld [vmem:[%s3 + $0x90] sm:$0xff]
      %v565 = vld [vmem:[%s3 + $0x98] sm:$0xff]
      %v566 = vld [vmem:[%s3 + $0xa0] sm:$0xff]
      %v567 = vld [vmem:[%s3 + $0xa8] sm:$0xff]
      %v568 = vld [vmem:[%s3 + $0xb0] sm:$0xff]
      %v569 = vld [vmem:[%s3 + $0xb8] sm:$0xff]
      %v570 = vld [vmem:[%s3 + $0xc0] sm:$0xff]
      %v571 = vld [vmem:[%s3 + $0xc8] sm:$0xff]
      %v572 = vld [vmem:[%s3 + $0xd0] sm:$0xff]
      %v573 = vld [vmem:[%s3 + $0xd8] sm:$0xff]
      %v574 = vld [vmem:[%s3 + $0xe0] sm:$0xff]
      %v575 = vld [vmem:[%s3 + $0xe8] sm:$0xff]
      %v576 = vld [vmem:[%s3 + $0xf0] sm:$0xff]
      %v577 = vld [vmem:[%s3 + $0xf8] sm:$0xff]
      %v578 = vld [vmem:[%s3 + $0x100] sm:$0xff]
      %v579 = vld [vmem:[%s3 + $0x108] sm:$0xff]
      %v580 = vld [vmem:[%s3 + $0x110] sm:$0xff]
      %v581 = vld [vmem:[%s3 + $0x118] sm:$0xff]
      %v582 = vld [vmem:[%s3 + $0x120] sm:$0xff]
      %v583 = vld [vmem:[%s3 + $0x128] sm:$0xff]
      %v584 = vld [vmem:[%s3 + $0x130] sm:$0xff]
      %v585 = vld [vmem:[%s3 + $0x138] sm:$0xff]
      %v586 = vld [vmem:[%s3 + $0x140] sm:$0xff]
      %v587 = vld [vmem:[%s3 + $0x148] sm:$0xff]
      %v588 = vld [vmem:[%s3 + $0x150] sm:$0xff]
      %v589 = vld [vmem:[%s3 + $0x158] sm:$0xff]
      %v590 = vld [vmem:[%s3 + $0x160] sm:$0xff]
      %v591 = vld [vmem:[%s3 + $0x168] sm:$0xff]
      %v592 = vld [vmem:[%s3 + $0x170] sm:$0xff]
      %v593 = vld [vmem:[%s3 + $0x178] sm:$0xff]
      %v594 = vld [vmem:[%s3 + $0x180] sm:$0xff]
      %v595 = vld [vmem:[%s3 + $0x188] sm:$0xff]
      %v596 = vld [vmem:[%s3 + $0x190] sm:$0xff]
      %v597 = vld [vmem:[%s3 + $0x198] sm:$0xff]
      %v598 = vld [vmem:[%s3 + $0x1a0] sm:$0xff]
      %v599 = vld [vmem:[%s3 + $0x1a8] sm:$0xff]
      %vm600 = vcmask 392192
      %v601 = vsel %vm600, %v522, 0
      %v603 = vsel %vm600, %v523, 0
      %v605 = vsel %vm600, %v524, 0
      %v607 = vsel %vm600, %v525, 0
      %v609 = vsel %vm600, %v526, 0
      %v611 = vsel %vm600, %v527, 0
      %613 = vmatprep.subr.mxu0 0.0
      %614 = vmatpush1.msra.mxu0 %v546
      %615 = vmatprep.subr.mxu0 0.0
      %616 = vmatpush1.msra.mxu0 %v547
      %617 = vmatprep.subr.mxu0 0.0
      %618 = vmatpush1.msra.mxu0 %v548
      %619 = vmatprep.subr.mxu0 0.0
      %620 = vmatpush1.msra.mxu0 %v549
      %621 = vmatprep.subr.mxu0 0.0
      %622 = vmatpush1.msra.mxu0 %v550
      %623 = vmatprep.subr.mxu0 0.0
      %624 = vmatpush1.msra.mxu0 %v551
      %625 = vmatprep.subr.mxu0 0.0
      %626 = vmatpush1.msra.mxu0 %v552
      %627 = vmatprep.subr.mxu0 0.0
      %628 = vmatpush1.msra.mxu0 %v553
      %629 = vmatprep.subr.mxu0 0.0
      %630 = vmatpush1.msra.mxu0 %v554
      %631 = vmatprep.subr.mxu0 0.0
      %632 = vmatpush1.msra.mxu0 %v555
      %633 = vmatprep.subr.mxu0 0.0
      %634 = vmatpush1.msra.mxu0 %v556
      %635 = vmatprep.subr.mxu0 0.0
      %636 = vmatpush1.msra.mxu0 %v557
      %637 = vmatprep.subr.mxu0 0.0
      %638 = vmatpush1.msra.mxu0 %v558
      %639 = vmatprep.subr.mxu0 0.0
      %640 = vmatpush1.msra.mxu0 %v559
      %641 = vmatprep.subr.mxu0 0.0
      %642 = vmatpush1.msra.mxu0 %v560
      %643 = vmatprep.subr.mxu0 0.0
      %644 = vmatpush1.msra.mxu0 %v561
      %645 = vmatprep.subr.mxu0 0.0
      %646 = vmatpush1.msra.mxu0 %v562
      %647 = vmatprep.subr.mxu0 0.0
      %648 = vmatpush1.msra.mxu0 %v563
      %649 = vmatprep.subr.mxu0 0.0
      %650 = vmatpush1.msra.mxu0 %v564
      %651 = vmatprep.subr.mxu0 0.0
      %652 = vmatpush1.msra.mxu0 %v565
      %653 = vmatprep.subr.mxu0 0.0
      %654 = vmatpush1.msra.mxu0 %v566
      %655 = vmatprep.subr.mxu0 0.0
      %656 = vmatpush1.msra.mxu0 %v567
      %657 = vmatprep.subr.mxu0 0.0
      %658 = vmatpush1.msra.mxu0 %v568
      %659 = vmatprep.subr.mxu0 0.0
      %660 = vmatpush1.msra.mxu0 %v569
      %661 = vmatprep.subr.mxu0 0.0
      %662 = vmatpush1.msra.mxu0 %v570
      %663 = vmatprep.subr.mxu0 0.0
      %664 = vmatpush1.msra.mxu0 %v571
      %665 = vmatprep.subr.mxu0 0.0
      %666 = vmatpush1.msra.mxu0 %v572
      %667 = vmatprep.subr.mxu0 0.0
      %668 = vmatpush1.msra.mxu0 %v573
      %669 = vmatprep.subr.mxu0 0.0
      %670 = vmatpush1.msra.mxu0 %v574
      %671 = vmatprep.subr.mxu0 0.0
      %672 = vmatpush1.msra.mxu0 %v575
      %673 = vmatprep.subr.mxu0 0.0
      %674 = vmatpush1.msra.mxu0 %v576
      %675 = vmatprep.subr.mxu0 0.0
      %676 = vmatpush1.msra.mxu0 %v577
      %677 = vmatprep.mubr.f32.mxu0 %v534
      %678 = vmatmul.mubr.f32.gmra.mrb[0].mxu0 %v368
      %v679 = vpop.f32.mrb[0].mxu0
      %v680 = vadd.f32 0.0, %v679
      %v681 = vpop.f32.mrb[0].mxu0
      %682 = vmatprep.mubr.f32.mxu0 %v535
      %683 = vmatmul.mubr.f32.gmra.mrb[0].mxu0 %v335
      %v684 = vpop.f32.mrb[0].mxu0
      %v685 = vadd.f32 0.0, %v684
      %v686 = vpop.f32.mrb[0].mxu0
      %687 = vmatprep.mubr.f32.mxu0 %v536
      %688 = vmatmul.mubr.f32.gmra.mrb[0].mxu0 %v370
      %v689 = vpop.f32.mrb[0].mxu0
      %v690 = vadd.f32 0.0, %v689
      %v691 = vpop.f32.mrb[0].mxu0
      %692 = vmatprep.mubr.f32.mxu0 %v537
      %693 = vmatmul.mubr.f32.gmra.mrb[0].mxu0 %v341
      %v694 = vpop.f32.mrb[0].mxu0
      %v695 = vadd.f32 0.0, %v694
      %v696 = vpop.f32.mrb[0].mxu0
      %697 = vmatprep.mubr.f32.mxu0 %v538
      %698 = vmatmul.mubr.f32.gmra.mrb[0].mxu0 %v372
      %v699 = vpop.f32.mrb[0].mxu0
      %v700 = vadd.f32 0.0, %v699
      %v701 = vpop.f32.mrb[0].mxu0
      %702 = vmatprep.mubr.f32.mxu0 %v539
      %703 = vmatmul.mubr.f32.gmra.mrb[0].mxu0 %v347
      %v704 = vpop.f32.mrb[0].mxu0
      %v705 = vadd.f32 0.0, %v704
      %v706 = vpop.f32.mrb[0].mxu0
      %707 = vdwg.mxu0
      %708 = vmatprep.subr.mxu0 0.0
      %709 = vmatpush1.msra.mxu0 %v578
      %710 = vmatprep.subr.mxu0 0.0
      %711 = vmatpush1.msra.mxu0 %v579
      %712 = vmatprep.subr.mxu0 0.0
      %713 = vmatpush1.msra.mxu0 %v580
      %714 = vmatprep.subr.mxu0 0.0
      %715 = vmatpush1.msra.mxu0 %v581
      %716 = vmatprep.subr.mxu0 0.0
      %717 = vmatpush1.msra.mxu0 %v582
      %718 = vmatprep.subr.mxu0 0.0
      %719 = vmatpush1.msra.mxu0 %v583
      %720 = vmatprep.subr.mxu0 0.0
      %721 = vmatpush1.msra.mxu0 %v584
      %722 = vmatprep.subr.mxu0 0.0
      %723 = vmatpush1.msra.mxu0 %v585
      %724 = vmatprep.subr.mxu0 0.0
      %725 = vmatpush1.msra.mxu0 %v586
      %726 = vmatprep.subr.mxu0 0.0
      %727 = vmatpush1.msra.mxu0 %v587
      %728 = vmatprep.subr.mxu0 0.0
      %729 = vmatpush1.msra.mxu0 %v588
      %730 = vmatprep.subr.mxu0 0.0
      %731 = vmatpush1.msra.mxu0 %v589
      %732 = vmatprep.subr.mxu0 0.0
      %733 = vmatpush1.msra.mxu0 %v590
      %734 = vmatprep.subr.mxu0 0.0
      %735 = vmatpush1.msra.mxu0 %v591
      %736 = vmatprep.subr.mxu0 0.0
      %737 = vmatpush1.msra.mxu0 %v592
      %738 = vmatprep.subr.mxu0 0.0
      %739 = vmatpush1.msra.mxu0 %v593
      %740 = vmatprep.subr.mxu0 0.0
      %741 = vmatpush1.msra.mxu0 %v594
      %742 = vmatprep.subr.mxu0 0.0
      %743 = vmatpush1.msra.mxu0 %v595
      %744 = vmatprep.subr.mxu0 0.0
      %745 = vmatpush1.msra.mxu0 %v596
      %746 = vmatprep.subr.mxu0 0.0
      %747 = vmatpush1.msra.mxu0 %v597
      %748 = vmatprep.subr.mxu0 0.0
      %749 = vmatpush1.msra.mxu0 %v598
      %750 = vmatprep.subr.mxu0 0.0
      %751 = vmatpush1.msra.mxu0 %v599
      %752 = vmatprep.subr.mxu0 0.0
      %753 = vmatpush1.msra.mxu0 0.0
      %754 = vmatprep.subr.mxu0 0.0
      %755 = vmatpush1.msra.mxu0 0.0
      %756 = vmatprep.subr.mxu0 0.0
      %757 = vmatpush1.msra.mxu0 0.0
      %758 = vmatprep.subr.mxu0 0.0
      %759 = vmatpush1.msra.mxu0 0.0
      %760 = vmatprep.subr.mxu0 0.0
      %761 = vmatpush1.msra.mxu0 0.0
      %762 = vmatprep.subr.mxu0 0.0
      %763 = vmatpush1.msra.mxu0 0.0
      %764 = vmatprep.subr.mxu0 0.0
      %765 = vmatpush1.msra.mxu0 0.0
      %766 = vmatprep.subr.mxu0 0.0
      %767 = vmatpush1.msra.mxu0 0.0
      %768 = vmatprep.subr.mxu0 0.0
      %769 = vmatpush1.msra.mxu0 0.0
      %770 = vmatprep.subr.mxu0 0.0
      %771 = vmatpush1.msra.mxu0 0.0
      %772 = vmatprep.mubr.f32.mxu0 %v601
      %773 = vmatmul.mubr.f32.gmra.mrb[0].mxu0 %v540
      %v774 = vpop.f32.mrb[0].mxu0
      %v775 = vadd.f32 %v680, %v774
      %v776 = vpop.f32.mrb[0].mxu0
      %777 = vmatprep.mubr.f32.mxu0 %v603
      %778 = vmatmul.mubr.f32.gmra.mrb[0].mxu0 %v541
      %v779 = vpop.f32.mrb[0].mxu0
      %v780 = vadd.f32 %v685, %v779
      %v781 = vpop.f32.mrb[0].mxu0
      %782 = vmatprep.mubr.f32.mxu0 %v605
      %783 = vmatmul.mubr.f32.gmra.mrb[0].mxu0 %v542
      %v784 = vpop.f32.mrb[0].mxu0
      %v785 = vadd.f32 %v690, %v784
      %v786 = vpop.f32.mrb[0].mxu0
      %787 = vmatprep.mubr.f32.mxu0 %v607
      %788 = vmatmul.mubr.f32.gmra.mrb[0].mxu0 %v543
      %v789 = vpop.f32.mrb[0].mxu0
      %v790 = vadd.f32 %v695, %v789
      %v791 = vpop.f32.mrb[0].mxu0
      %792 = vmatprep.mubr.f32.mxu0 %v609
      %793 = vmatmul.mubr.f32.gmra.mrb[0].mxu0 %v544
      %v794 = vpop.f32.mrb[0].mxu0
      %v795 = vadd.f32 %v700, %v794
      %v796 = vpop.f32.mrb[0].mxu0
      %797 = vmatprep.mubr.f32.mxu0 %v611
      %798 = vmatmul.mubr.f32.gmra.mrb[0].mxu0 %v545
      %v799 = vpop.f32.mrb[0].mxu0
      %v800 = vadd.f32 %v705, %v799
      %v801 = vpop.f32.mrb[0].mxu0
      %802 = vdwg.mxu0
      %803 = vst [vmem:[%s238] sm:$0xff] %v775
      %804 = vst [vmem:[%s238 + $0x8] sm:$0xff] %v780
      %805 = vst [vmem:[%s238 + $0x10] sm:$0xff] %v785
      %806 = vst [vmem:[%s238 + $0x18] sm:$0xff] %v790
      %807 = vst [vmem:[%s238 + $0x20] sm:$0xff] %v795
      %808 = vst [vmem:[%s238 + $0x28] sm:$0xff] %v800
      %v809 = vadd.f32 %v775, %v780
      %v810 = vadd.f32 %v809, %v785
      %v811 = vadd.f32 %v810, %v790
      %v812 = vadd.f32 %v811, %v795
      %v813 = vadd.f32 %v812, %v800
      %v814 = vrot.slane %v813, 4
      %v815 = vadd.f32 %v813, %v814
      %v816 = vrot.slane %v815, 2
      %v817 = vadd.f32 %v815, %v816
      %v818 = vrot.slane %v817, 1
      %v819 = vadd.f32 %v817, %v818
      %v820 = vmul.f32 %v775, %v775
      %v821 = vmul.f32 %v780, %v780
      %v822 = vmul.f32 %v785, %v785
      %v823 = vmul.f32 %v790, %v790
      %v824 = vmul.f32 %v795, %v795
      %v825 = vmul.f32 %v800, %v800
      %v826 = vadd.f32 %v820, %v821
      %v827 = vadd.f32 %v826, %v822
      %v828 = vadd.f32 %v827, %v823
      %v829 = vadd.f32 %v828, %v824
      %v830 = vadd.f32 %v829, %v825
      %v831 = vrot.slane %v830, 4
      %v832 = vadd.f32 %v830, %v831
      %v833 = vrot.slane %v832, 2
      %v834 = vadd.f32 %v832, %v833
      %v835 = vrot.slane %v834, 1
      %v836 = vadd.f32 %v834, %v835
      %v837 = vsel %vm331, %v819, %v836
      %838 = vst [vmem:[%s243] sm:$0x3] %v837
      %s839 = smul.u32 3, %s17
      %p840 = scmp.lt.s32.totalorder %s839, 5
      %s841 = scalar_select %p840, %s839, 5
      %s842 = smul.addr %s841, 2
      %s843 = smul.addr %s842, 8
      %s844 = scalar_lea.vmem %s4, %s843
      %p845 = scmp.lt.s32.totalorder %s17, 1
      %s846 = scalar_select %p845, %s17, 1
      %s847 = smul.addr %s846, 2
      %s848 = scalar_lea.vmem %s5, %s847
      // Predicated region
      $region37: #{basic_3d_block_spatial.3} parent=35 // pred_check
        %p849 = pneg %p124
      $region38: #{basic_3d_block_spatial.3} parent=35 // pred_check_branch
        %851 = sbr.rel (%p849) target = $region40
      $region39: #{basic_3d_block_spatial.3} parent=35 // pred_region
        %s852 = smul.u32 3, %s17
      $region40: #{basic_3d_block_spatial.3} parent=35 // pred_fallthru
        _
      // Predicated region
      $region41: #{basic_3d_block_spatial.3} parent=35 // pred_check
        %p853 = pneg %p150
      $region42: #{basic_3d_block_spatial.3} parent=35 // pred_check_branch
        %855 = sbr.rel (%p853) target = $region44
      $region43: #{basic_3d_block_spatial.3} parent=35 // pred_region
        _
      $region44: #{basic_3d_block_spatial.3} parent=35 // pred_fallthru
        _
    $region36: #{basic_3d_block_spatial.3} parent=5 // pred_fallthru
      _
    %p856 = scmp.le.s32.totalorder 2, %s12
    // Predicated region
    $region45: #{basic_3d_block_spatial.3} parent=5 // pred_check
      %p857 = pneg %p856
    $region46: #{basic_3d_block_spatial.3} parent=5 // pred_check_branch
      %859 = sbr.rel (%p857) target = $region48
    $region47: #{basic_3d_block_spatial.3} parent=5 // pred_region
      %s860 = ssub.s32 %s12, 2
      // Predicated region
      $region49: #{basic_3d_block_spatial.3} parent=47 // pred_check
        %p861 = pneg %p130
      $region50: #{basic_3d_block_spatial.3} parent=47 // pred_check_branch
        %863 = sbr.rel (%p861) target = $region52
      $region51: #{basic_3d_block_spatial.3} parent=47 // pred_region
        %s864 = smul.u32 3, %s18
        %p865 = scmp.lt.s32.totalorder %s864, 5
        %s866 = scalar_select %p865, %s864, 5
        %s867 = smul.addr %s866, 2
        %s868 = smul.addr %s867, 8
        %s869 = scalar_lea.vmem %s4, %s868
      $region52: #{basic_3d_block_spatial.3} parent=47 // pred_fallthru
        _
      // Predicated region
      $region53: #{basic_3d_block_spatial.3} parent=47 // pred_check
        %p870 = pneg %p156
      $region54: #{basic_3d_block_spatial.3} parent=47 // pred_check_branch
        %872 = sbr.rel (%p870) target = $region56
      $region55: #{basic_3d_block_spatial.3} parent=47 // pred_region
        %p873 = scmp.lt.s32.totalorder %s18, 1
        %s874 = scalar_select %p873, %s18, 1
        %s875 = smul.addr %s874, 2
        %s876 = scalar_lea.vmem %s5, %s875
      $region56: #{basic_3d_block_spatial.3} parent=47 // pred_fallthru
        _
    $region48: #{basic_3d_block_spatial.3} parent=5 // pred_fallthru
      _
  $region6: #{basic_3d_block_spatial.3} parent=0 // loop_footer
    %s16 = sadd.s32 1, %s12
  $region7: #{basic_3d_block_spatial.3} parent=0 // loop_footer_branch
    %11 = sbr.rel target = $region3
  $region8: #{basic_3d_block_spatial.3} parent=0 // loop_exit
    _

</llo_original>
